<compile_context>
chip_gen: v7x
topology: tpu7x:2x2x1
jax: 0.10.0
libtpu: 0.0.40
codegen_flags: <defaults>
</compile_context>

<pallas_src>
import jax
import jax.numpy as jnp
from jax.experimental import pallas as pl
from jax.experimental.pallas import tpu as pltpu

# Set to jnp.bfloat16 on v6e/v7x for 2x MXU rate and half the im2col HBM traffic
# (accumulation / bias / ReLU stay f32).  Kept f32 by default to match PyTorch
# numerics exactly.
COMPUTE_DTYPE = jnp.float32


# ----------------------------- Pallas kernels -----------------------------

def _conv_relu_pool_kernel(w_ref, b_ref, p00_ref, p01_ref, p10_ref, p11_ref, o_ref):
    """out = relu(max(W@p00, W@p01, W@p10, W@p11) + b)  -- fused conv+bias+relu+pool."""
    w = w_ref[...]
    z = jnp.maximum(
        jnp.maximum(jnp.dot(w, p00_ref[...], preferred_element_type=jnp.float32),
                    jnp.dot(w, p01_ref[...], preferred_element_type=jnp.float32)),
        jnp.maximum(jnp.dot(w, p10_ref[...], preferred_element_type=jnp.float32),
                    jnp.dot(w, p11_ref[...], preferred_element_type=jnp.float32)))
    o_ref[...] = jnp.maximum(z + b_ref[...], 0.0).astype(o_ref.dtype)


def _fc_fused_kernel(x_ref, w1_ref, b1_ref, w2_ref, b2_ref, w3_ref, b3_ref, o_ref):
    """relu(x@W1+b1) -> relu(.@W2+b2) -> .@W3+b3, all intermediates stay in VMEM."""
    h = jnp.dot(x_ref[...], w1_ref[...], preferred_element_type=jnp.float32) + b1_ref[...]
    h = jnp.maximum(h, 0.0).astype(w2_ref.dtype)
    h = jnp.dot(h, w2_ref[...], preferred_element_type=jnp.float32) + b2_ref[...]
    h = jnp.maximum(h, 0.0).astype(w3_ref.dtype)
    o_ref[...] = (jnp.dot(h, w3_ref[...], preferred_element_type=jnp.float32)
                  + b3_ref[...]).astype(o_ref.dtype)


# --------------------------- Pallas call wrappers --------------------------

def conv_relu_pool(x_cbhw, wmat, bcol, kh, kw, *, tile_m=1024):
    """Fused valid conv (stride 1) + bias + ReLU + MaxPool2d(2, 2).

    x_cbhw: (Cin, B, H, W) channel-major activations.
    wmat:   (Cout, Cin*kh*kw)  (PyTorch (Cout, Cin, kh, kw) flattened).
    bcol:   (Cout, 1)
    returns (Cout, B, Hp, Wp) channel-major pooled activations, f32.
    """
    Cin, B, H, W = x_cbhw.shape
    Cout, K = wmat.shape
    assert K == Cin * kh * kw
    Ho, Wo = H - kh + 1, W - kw + 1
    Hp, Wp = Ho // 2, Wo // 2
    Mp = B * Hp * Wp

    # im2col restricted to one pool offset (dh, dw); columns indexed (b, hp, wp),
    # rows indexed (c, ki, kj) to match the PyTorch weight flattening order.
    def patches(dh, dw):
        cols = [x_cbhw[:, :, dh + ki: dh + ki + 2 * Hp: 2,
                             dw + kj: dw + kj + 2 * Wp: 2]
                for ki in range(kh) for kj in range(kw)]          # (Cin,B,Hp,Wp) each
        p = jnp.stack(cols, axis=1)                               # (Cin, kh*kw, B, Hp, Wp)
        return p.reshape(K, Mp).astype(COMPUTE_DTYPE)

    p00, p01, p10, p11 = patches(0, 0), patches(0, 1), patches(1, 0), patches(1, 1)
    wmat = wmat.astype(COMPUTE_DTYPE)

    # Lane-dim tile: full dim if it fits, otherwise a multiple of 128.
    tm = Mp if Mp <= tile_m else tile_m
    grid = (pl.cdiv(Mp, tm),)

    # Explicit VMEM budget: weights + bias + 4 patch blocks + out block, with
    # headroom for double buffering.  Clamped to v7x's 64 MiB physical VMEM.
    bpe = jnp.dtype(COMPUTE_DTYPE).itemsize
    block_bytes = Cout * K * bpe + Cout * 4 + 4 * K * tm * bpe + Cout * tm * 4
    vmem_limit = int(min(64 * 1024 * 1024, max(4 * block_bytes, 16 * 1024 * 1024)))

    p_spec = pl.BlockSpec((K, tm), lambda i: (0, i))
    out = pl.pallas_call(
        _conv_relu_pool_kernel,
        out_shape=jax.ShapeDtypeStruct((Cout, Mp), jnp.float32),
        grid=grid,
        in_specs=[pl.BlockSpec((Cout, K), lambda i: (0, 0)),
                  pl.BlockSpec((Cout, 1), lambda i: (0, 0)),
                  p_spec, p_spec, p_spec, p_spec],
        out_specs=pl.BlockSpec((Cout, tm), lambda i: (0, i)),
        compiler_params=pltpu.CompilerParams(
            dimension_semantics=("parallel",),
            vmem_limit_bytes=vmem_limit),
    )(wmat, bcol, p00, p01, p10, p11)
    return out.reshape(Cout, B, Hp, Wp)


def fc_stack(x, w1, b1, w2, b2, w3, b3, *, tile_b=256):
    """Fused fc1+ReLU, fc2+ReLU, fc3 in a single Pallas kernel. x: (B, 400)."""
    B, K = x.shape
    N1, N2, N3 = w1.shape[1], w2.shape[1], w3.shape[1]
    tb = B if B <= tile_b else tile_b
    grid = (pl.cdiv(B, tb),)

    bpe = jnp.dtype(COMPUTE_DTYPE).itemsize
    block_bytes = (tb * K * bpe + (K * N1 + N1 * N2 + N2 * N3) * bpe
                   + 4 * (N1 + N2 + N3) + tb * N3 * 4)
    vmem_limit = int(min(64 * 1024 * 1024, max(4 * block_bytes, 16 * 1024 * 1024)))

    return pl.pallas_call(
        _fc_fused_kernel,
        out_shape=jax.ShapeDtypeStruct((B, N3), jnp.float32),
        grid=grid,
        in_specs=[pl.BlockSpec((tb, K), lambda i: (i, 0)),
                  pl.BlockSpec((K, N1), lambda i: (0, 0)),
                  pl.BlockSpec((1, N1), lambda i: (0, 0)),
                  pl.BlockSpec((N1, N2), lambda i: (0, 0)),
                  pl.BlockSpec((1, N2), lambda i: (0, 0)),
                  pl.BlockSpec((N2, N3), lambda i: (0, 0)),
                  pl.BlockSpec((1, N3), lambda i: (0, 0))],
        out_specs=pl.BlockSpec((tb, N3), lambda i: (i, 0)),
        compiler_params=pltpu.CompilerParams(
            dimension_semantics=("parallel",),
            vmem_limit_bytes=vmem_limit),
    )(x.astype(COMPUTE_DTYPE),
      w1.astype(COMPUTE_DTYPE), b1,
      w2.astype(COMPUTE_DTYPE), b2,
      w3.astype(COMPUTE_DTYPE), b3)


# --------------------------------- model -----------------------------------

def init_params(key):
    def uniform(k, shape, fan_in):
        bound = 1.0 / jnp.sqrt(jnp.float32(fan_in))
        return jax.random.uniform(k, shape, jnp.float32, -bound, bound)

    ks = jax.random.split(key, 10)
    return {
        "conv1_w": uniform(ks[0], (6, 3, 5, 5), 3 * 5 * 5),
        "conv1_b": uniform(ks[1], (6,), 3 * 5 * 5),
        "conv2_w": uniform(ks[2], (16, 6, 5, 5), 6 * 5 * 5),
        "conv2_b": uniform(ks[3], (16,), 6 * 5 * 5),
        "fc1_w": uniform(ks[4], (120, 16 * 5 * 5), 16 * 5 * 5),  # torch (out, in)
        "fc1_b": uniform(ks[5], (120,), 16 * 5 * 5),
        "fc2_w": uniform(ks[6], (84, 120), 120),
        "fc2_b": uniform(ks[7], (84,), 120),
        "fc3_w": uniform(ks[8], (10, 84), 84),
        "fc3_b": uniform(ks[9], (10,), 84),
    }


def prepare_params(p):
    """One-time (outside jit) reshape/transpose into the kernel-friendly layout."""
    return {
        "conv1_w": p["conv1_w"].reshape(6, -1),   # (Cout, Cin*kh*kw)
        "conv1_b": p["conv1_b"].reshape(6, 1),
        "conv2_w": p["conv2_w"].reshape(16, -1),
        "conv2_b": p["conv2_b"].reshape(16, 1),
        "fc1_w": p["fc1_w"].T,                    # (in, out) -- pre-transposed
        "fc1_b": p["fc1_b"].reshape(1, -1),
        "fc2_w": p["fc2_w"].T,
        "fc2_b": p["fc2_b"].reshape(1, -1),
        "fc3_w": p["fc3_w"].T,
        "fc3_b": p["fc3_b"].reshape(1, -1),
    }


@jax.jit
def cnn_forward(prep, x):
    """x: (B, 3, 32, 32) NCHW (PyTorch layout) -> logits (B, 10)."""
    xc = jnp.transpose(x, (1, 0, 2, 3))                                    # (3, B, 32, 32)
    a1 = conv_relu_pool(xc, prep["conv1_w"], prep["conv1_b"], 5, 5)        # (6, B, 14, 14)
    a2 = conv_relu_pool(a1, prep["conv2_w"], prep["conv2_b"], 5, 5)        # (16, B, 5, 5)
    xf = jnp.transpose(a2, (1, 0, 2, 3)).reshape(x.shape[0], 16 * 5 * 5)   # torch.flatten order
    return fc_stack(xf, prep["fc1_w"], prep["fc1_b"],
                    prep["fc2_w"], prep["fc2_b"],
                    prep["fc3_w"], prep["fc3_b"])


# ------------------------ pure-JAX reference (self-check) -------------------

def reference_forward(params, x):
    def conv(x, w, b):
        y = jax.lax.conv_general_dilated(
            x, w, window_strides=(1, 1), padding="VALID",
            dimension_numbers=("NCHW", "OIHW", "NCHW"))
        return jax.nn.relu(y + b.reshape(1, -1, 1, 1))

    def pool(x):
        return jax.lax.reduce_window(x, -jnp.inf, jax.lax.max,
                                     (1, 1, 2, 2), (1, 1, 2, 2), "VALID")

    y = pool(conv(x, params["conv1_w"], params["conv1_b"]))
    y = pool(conv(y, params["conv2_w"], params["conv2_b"]))
    y = y.reshape(y.shape[0], -1)
    y = jax.nn.relu(y @ params["fc1_w"].T + params["fc1_b"])
    y = jax.nn.relu(y @ params["fc2_w"].T + params["fc2_b"])
    return y @ params["fc3_w"].T + params["fc3_b"]


if __name__ == "__main__":
    key = jax.random.PRNGKey(0)
    pkey, xkey = jax.random.split(key)
    params = init_params(pkey)
    prep = prepare_params(params)
    x = jax.random.normal(xkey, (2, 3, 32, 32), jnp.float32)

    out = cnn_forward(prep, x)
    jax.block_until_ready(out)
    assert out.shape == (2, 10), out.shape

    ref = reference_forward(params, x)
    err = float(jnp.max(jnp.abs(out - ref)))
    assert err < 1e-2, f"max abs error vs reference = {err}"

    print("KERNEL_OK")
</pallas_src>

<mosaic_0001>
module attributes {stable_mosaic.version = 11 : i64} {
  func.func @_conv_relu_pool_kernel(%arg0: i32, %arg1: memref<6x75xf32, #tpu.memory_space<vmem>>, %arg2: memref<6x1xf32, #tpu.memory_space<vmem>>, %arg3: memref<75x392xf32, #tpu.memory_space<vmem>>, %arg4: memref<75x392xf32, #tpu.memory_space<vmem>>, %arg5: memref<75x392xf32, #tpu.memory_space<vmem>>, %arg6: memref<75x392xf32, #tpu.memory_space<vmem>>, %arg7: memref<6x392xf32, #tpu.memory_space<vmem>>) attributes {dimension_semantics = [#tpu.dimension_semantics<parallel>], iteration_bounds = array<i64: 1>, scalar_prefetch = 0 : i64, scratch_operands = 0 : i64, tpu.core_type = #tpu.core_type<tc>, window_params = [{pipeline_mode = #tpu.pipeline_mode<synchronous>, transform_indices = @transform_0, window_bounds = array<i64: 6, 75>}, {pipeline_mode = #tpu.pipeline_mode<synchronous>, transform_indices = @transform_1, window_bounds = array<i64: 6, 1>}, {transform_indices = @transform_2, window_bounds = array<i64: 75, 392>}, {transform_indices = @transform_3, window_bounds = array<i64: 75, 392>}, {transform_indices = @transform_4, window_bounds = array<i64: 75, 392>}, {transform_indices = @transform_5, window_bounds = array<i64: 75, 392>}, {transform_indices = @transform_6, window_bounds = array<i64: 6, 392>}]} {
    %c0 = arith.constant 0 : index
    %c0_0 = arith.constant 0 : index
    %0 = vector.load %arg1[%c0, %c0_0] : memref<6x75xf32, #tpu.memory_space<vmem>>, vector<6x75xf32>
    %c0_1 = arith.constant 0 : index
    %c0_2 = arith.constant 0 : index
    %1 = vector.load %arg3[%c0_1, %c0_2] : memref<75x392xf32, #tpu.memory_space<vmem>>, vector<75x392xf32>
    %cst = arith.constant dense<0.000000e+00> : vector<6x392xf32>
    %2 = tpu.matmul %0, %1, %cst {dimension_numbers = #tpu.dot_dimension_numbers<[1], [0], [0], [1], [0, 0, 1, 1], [], []>} : vector<6x75xf32>, vector<75x392xf32>, vector<6x392xf32> -> vector<6x392xf32>
    %c0_3 = arith.constant 0 : index
    %c0_4 = arith.constant 0 : index
    %3 = vector.load %arg4[%c0_3, %c0_4] : memref<75x392xf32, #tpu.memory_space<vmem>>, vector<75x392xf32>
    %cst_5 = arith.constant dense<0.000000e+00> : vector<6x392xf32>
    %4 = tpu.matmul %0, %3, %cst_5 {dimension_numbers = #tpu.dot_dimension_numbers<[1], [0], [0], [1], [0, 0, 1, 1], [], []>} : vector<6x75xf32>, vector<75x392xf32>, vector<6x392xf32> -> vector<6x392xf32>
    %5 = arith.maximumf %2, %4 : vector<6x392xf32>
    %c0_6 = arith.constant 0 : index
    %c0_7 = arith.constant 0 : index
    %6 = vector.load %arg5[%c0_6, %c0_7] : memref<75x392xf32, #tpu.memory_space<vmem>>, vector<75x392xf32>
    %cst_8 = arith.constant dense<0.000000e+00> : vector<6x392xf32>
    %7 = tpu.matmul %0, %6, %cst_8 {dimension_numbers = #tpu.dot_dimension_numbers<[1], [0], [0], [1], [0, 0, 1, 1], [], []>} : vector<6x75xf32>, vector<75x392xf32>, vector<6x392xf32> -> vector<6x392xf32>
    %c0_9 = arith.constant 0 : index
    %c0_10 = arith.constant 0 : index
    %8 = vector.load %arg6[%c0_9, %c0_10] : memref<75x392xf32, #tpu.memory_space<vmem>>, vector<75x392xf32>
    %cst_11 = arith.constant dense<0.000000e+00> : vector<6x392xf32>
    %9 = tpu.matmul %0, %8, %cst_11 {dimension_numbers = #tpu.dot_dimension_numbers<[1], [0], [0], [1], [0, 0, 1, 1], [], []>} : vector<6x75xf32>, vector<75x392xf32>, vector<6x392xf32> -> vector<6x392xf32>
    %10 = arith.maximumf %7, %9 : vector<6x392xf32>
    %11 = arith.maximumf %5, %10 : vector<6x392xf32>
    %c0_12 = arith.constant 0 : index
    %c0_13 = arith.constant 0 : index
    %12 = vector.load %arg2[%c0_12, %c0_13] : memref<6x1xf32, #tpu.memory_space<vmem>>, vector<6x1xf32>
    %13 = vector.broadcast %12 : vector<6x1xf32> to vector<6x392xf32>
    %14 = arith.addf %11, %13 : vector<6x392xf32>
    %cst_14 = arith.constant 0.000000e+00 : f32
    %15 = vector.broadcast %cst_14 : f32 to vector<6x392xf32>
    %16 = arith.maximumf %14, %15 : vector<6x392xf32>
    %c0_15 = arith.constant 0 : index
    %c0_16 = arith.constant 0 : index
    %17 = vector.load %arg7[%c0_15, %c0_16] : memref<6x392xf32, #tpu.memory_space<vmem>>, vector<6x392xf32>
    tpu.vector_store %arg7[%c0_15, %c0_16], %16 {strides = array<i32>} : memref<6x392xf32, #tpu.memory_space<vmem>>, vector<6x392xf32>,
    return
  }
  func.func @transform_0(%arg0: i32) -> (i32, i32) {
    %c0_i32 = arith.constant 0 : i32
    %c0_i32_0 = arith.constant 0 : i32
    %c0_i32_1 = arith.constant 0 : i32
    return %c0_i32, %c0_i32_0 : i32, i32
  }
  func.func @transform_1(%arg0: i32) -> (i32, i32) {
    %c0_i32 = arith.constant 0 : i32
    %c0_i32_0 = arith.constant 0 : i32
    %c0_i32_1 = arith.constant 0 : i32
    return %c0_i32, %c0_i32_0 : i32, i32
  }
  func.func @transform_2(%arg0: i32) -> (i32, i32) {
    %c0_i32 = arith.constant 0 : i32
    %c0_i32_0 = arith.constant 0 : i32
    return %c0_i32, %arg0 : i32, i32
  }
  func.func @transform_3(%arg0: i32) -> (i32, i32) {
    %c0_i32 = arith.constant 0 : i32
    %c0_i32_0 = arith.constant 0 : i32
    return %c0_i32, %arg0 : i32, i32
  }
  func.func @transform_4(%arg0: i32) -> (i32, i32) {
    %c0_i32 = arith.constant 0 : i32
    %c0_i32_0 = arith.constant 0 : i32
    return %c0_i32, %arg0 : i32, i32
  }
  func.func @transform_5(%arg0: i32) -> (i32, i32) {
    %c0_i32 = arith.constant 0 : i32
    %c0_i32_0 = arith.constant 0 : i32
    return %c0_i32, %arg0 : i32, i32
  }
  func.func @transform_6(%arg0: i32) -> (i32, i32) {
    %c0_i32 = arith.constant 0 : i32
    %c0_i32_0 = arith.constant 0 : i32
    return %c0_i32, %arg0 : i32, i32
  }
}

module attributes {stable_mosaic.version = 11 : i64} {
  func.func @_conv_relu_pool_kernel(%arg0: i32, %arg1: memref<16x150xf32, #tpu.memory_space<vmem>>, %arg2: memref<16x1xf32, #tpu.memory_space<vmem>>, %arg3: memref<150x50xf32, #tpu.memory_space<vmem>>, %arg4: memref<150x50xf32, #tpu.memory_space<vmem>>, %arg5: memref<150x50xf32, #tpu.memory_space<vmem>>, %arg6: memref<150x50xf32, #tpu.memory_space<vmem>>, %arg7: memref<16x50xf32, #tpu.memory_space<vmem>>) attributes {dimension_semantics = [#tpu.dimension_semantics<parallel>], iteration_bounds = array<i64: 1>, scalar_prefetch = 0 : i64, scratch_operands = 0 : i64, tpu.core_type = #tpu.core_type<tc>, window_params = [{pipeline_mode = #tpu.pipeline_mode<synchronous>, transform_indices = @transform_0, window_bounds = array<i64: 16, 150>}, {pipeline_mode = #tpu.pipeline_mode<synchronous>, transform_indices = @transform_1, window_bounds = array<i64: 16, 1>}, {transform_indices = @transform_2, window_bounds = array<i64: 150, 50>}, {transform_indices = @transform_3, window_bounds = array<i64: 150, 50>}, {transform_indices = @transform_4, window_bounds = array<i64: 150, 50>}, {transform_indices = @transform_5, window_bounds = array<i64: 150, 50>}, {transform_indices = @transform_6, window_bounds = array<i64: 16, 50>}]} {
    %c0 = arith.constant 0 : index
    %c0_0 = arith.constant 0 : index
    %0 = vector.load %arg1[%c0, %c0_0] : memref<16x150xf32, #tpu.memory_space<vmem>>, vector<16x150xf32>
    %c0_1 = arith.constant 0 : index
    %c0_2 = arith.constant 0 : index
    %1 = vector.load %arg3[%c0_1, %c0_2] : memref<150x50xf32, #tpu.memory_space<vmem>>, vector<150x50xf32>
    %cst = arith.constant dense<0.000000e+00> : vector<16x50xf32>
    %2 = tpu.matmul %0, %1, %cst {dimension_numbers = #tpu.dot_dimension_numbers<[1], [0], [0], [1], [0, 0, 1, 1], [], []>} : vector<16x150xf32>, vector<150x50xf32>, vector<16x50xf32> -> vector<16x50xf32>
    %c0_3 = arith.constant 0 : index
    %c0_4 = arith.constant 0 : index
    %3 = vector.load %arg4[%c0_3, %c0_4] : memref<150x50xf32, #tpu.memory_space<vmem>>, vector<150x50xf32>
    %cst_5 = arith.constant dense<0.000000e+00> : vector<16x50xf32>
    %4 = tpu.matmul %0, %3, %cst_5 {dimension_numbers = #tpu.dot_dimension_numbers<[1], [0], [0], [1], [0, 0, 1, 1], [], []>} : vector<16x150xf32>, vector<150x50xf32>, vector<16x50xf32> -> vector<16x50xf32>
    %5 = arith.maximumf %2, %4 : vector<16x50xf32>
    %c0_6 = arith.constant 0 : index
    %c0_7 = arith.constant 0 : index
    %6 = vector.load %arg5[%c0_6, %c0_7] : memref<150x50xf32, #tpu.memory_space<vmem>>, vector<150x50xf32>
    %cst_8 = arith.constant dense<0.000000e+00> : vector<16x50xf32>
    %7 = tpu.matmul %0, %6, %cst_8 {dimension_numbers = #tpu.dot_dimension_numbers<[1], [0], [0], [1], [0, 0, 1, 1], [], []>} : vector<16x150xf32>, vector<150x50xf32>, vector<16x50xf32> -> vector<16x50xf32>
    %c0_9 = arith.constant 0 : index
    %c0_10 = arith.constant 0 : index
    %8 = vector.load %arg6[%c0_9, %c0_10] : memref<150x50xf32, #tpu.memory_space<vmem>>, vector<150x50xf32>
    %cst_11 = arith.constant dense<0.000000e+00> : vector<16x50xf32>
    %9 = tpu.matmul %0, %8, %cst_11 {dimension_numbers = #tpu.dot_dimension_numbers<[1], [0], [0], [1], [0, 0, 1, 1], [], []>} : vector<16x150xf32>, vector<150x50xf32>, vector<16x50xf32> -> vector<16x50xf32>
    %10 = arith.maximumf %7, %9 : vector<16x50xf32>
    %11 = arith.maximumf %5, %10 : vector<16x50xf32>
    %c0_12 = arith.constant 0 : index
    %c0_13 = arith.constant 0 : index
    %12 = vector.load %arg2[%c0_12, %c0_13] : memref<16x1xf32, #tpu.memory_space<vmem>>, vector<16x1xf32>
    %13 = vector.broadcast %12 : vector<16x1xf32> to vector<16x50xf32>
    %14 = arith.addf %11, %13 : vector<16x50xf32>
    %cst_14 = arith.constant 0.000000e+00 : f32
    %15 = vector.broadcast %cst_14 : f32 to vector<16x50xf32>
    %16 = arith.maximumf %14, %15 : vector<16x50xf32>
    %c0_15 = arith.constant 0 : index
    %c0_16 = arith.constant 0 : index
    %17 = vector.load %arg7[%c0_15, %c0_16] : memref<16x50xf32, #tpu.memory_space<vmem>>, vector<16x50xf32>
    tpu.vector_store %arg7[%c0_15, %c0_16], %16 {strides = array<i32>} : memref<16x50xf32, #tpu.memory_space<vmem>>, vector<16x50xf32>,
    return
  }
  func.func @transform_0(%arg0: i32) -> (i32, i32) {
    %c0_i32 = arith.constant 0 : i32
    %c0_i32_0 = arith.constant 0 : i32
    %c0_i32_1 = arith.constant 0 : i32
    return %c0_i32, %c0_i32_0 : i32, i32
  }
  func.func @transform_1(%arg0: i32) -> (i32, i32) {
    %c0_i32 = arith.constant 0 : i32
    %c0_i32_0 = arith.constant 0 : i32
    %c0_i32_1 = arith.constant 0 : i32
    return %c0_i32, %c0_i32_0 : i32, i32
  }
  func.func @transform_2(%arg0: i32) -> (i32, i32) {
    %c0_i32 = arith.constant 0 : i32
    %c0_i32_0 = arith.constant 0 : i32
    return %c0_i32, %arg0 : i32, i32
  }
  func.func @transform_3(%arg0: i32) -> (i32, i32) {
    %c0_i32 = arith.constant 0 : i32
    %c0_i32_0 = arith.constant 0 : i32
    return %c0_i32, %arg0 : i32, i32
  }
  func.func @transform_4(%arg0: i32) -> (i32, i32) {
    %c0_i32 = arith.constant 0 : i32
    %c0_i32_0 = arith.constant 0 : i32
    return %c0_i32, %arg0 : i32, i32
  }
  func.func @transform_5(%arg0: i32) -> (i32, i32) {
    %c0_i32 = arith.constant 0 : i32
    %c0_i32_0 = arith.constant 0 : i32
    return %c0_i32, %arg0 : i32, i32
  }
  func.func @transform_6(%arg0: i32) -> (i32, i32) {
    %c0_i32 = arith.constant 0 : i32
    %c0_i32_0 = arith.constant 0 : i32
    return %c0_i32, %arg0 : i32, i32
  }
}

module attributes {stable_mosaic.version = 11 : i64} {
  func.func @_fc_fused_kernel(%arg0: i32, %arg1: memref<2x400xf32, #tpu.memory_space<vmem>>, %arg2: memref<400x120xf32, #tpu.memory_space<vmem>>, %arg3: memref<1x120xf32, #tpu.memory_space<vmem>>, %arg4: memref<120x84xf32, #tpu.memory_space<vmem>>, %arg5: memref<1x84xf32, #tpu.memory_space<vmem>>, %arg6: memref<84x10xf32, #tpu.memory_space<vmem>>, %arg7: memref<1x10xf32, #tpu.memory_space<vmem>>, %arg8: memref<2x10xf32, #tpu.memory_space<vmem>>) attributes {dimension_semantics = [#tpu.dimension_semantics<parallel>], iteration_bounds = array<i64: 1>, scalar_prefetch = 0 : i64, scratch_operands = 0 : i64, tpu.core_type = #tpu.core_type<tc>, window_params = [{transform_indices = @transform_0, window_bounds = array<i64: 2, 400>}, {pipeline_mode = #tpu.pipeline_mode<synchronous>, transform_indices = @transform_1, window_bounds = array<i64: 400, 120>}, {pipeline_mode = #tpu.pipeline_mode<synchronous>, transform_indices = @transform_2, window_bounds = array<i64: 1, 120>}, {pipeline_mode = #tpu.pipeline_mode<synchronous>, transform_indices = @transform_3, window_bounds = array<i64: 120, 84>}, {pipeline_mode = #tpu.pipeline_mode<synchronous>, transform_indices = @transform_4, window_bounds = array<i64: 1, 84>}, {pipeline_mode = #tpu.pipeline_mode<synchronous>, transform_indices = @transform_5, window_bounds = array<i64: 84, 10>}, {pipeline_mode = #tpu.pipeline_mode<synchronous>, transform_indices = @transform_6, window_bounds = array<i64: 1, 10>}, {transform_indices = @transform_7, window_bounds = array<i64: 2, 10>}]} {
    %c0 = arith.constant 0 : index
    %c0_0 = arith.constant 0 : index
    %0 = vector.load %arg1[%c0, %c0_0] : memref<2x400xf32, #tpu.memory_space<vmem>>, vector<2x400xf32>
    %c0_1 = arith.constant 0 : index
    %c0_2 = arith.constant 0 : index
    %1 = vector.load %arg2[%c0_1, %c0_2] : memref<400x120xf32, #tpu.memory_space<vmem>>, vector<400x120xf32>
    %cst = arith.constant dense<0.000000e+00> : vector<2x120xf32>
    %2 = tpu.matmul %0, %1, %cst {dimension_numbers = #tpu.dot_dimension_numbers<[1], [0], [0], [1], [0, 0, 1, 1], [], []>} : vector<2x400xf32>, vector<400x120xf32>, vector<2x120xf32> -> vector<2x120xf32>
    %c0_3 = arith.constant 0 : index
    %c0_4 = arith.constant 0 : index
    %3 = vector.load %arg3[%c0_3, %c0_4] : memref<1x120xf32, #tpu.memory_space<vmem>>, vector<1x120xf32>
    %4 = vector.broadcast %3 : vector<1x120xf32> to vector<2x120xf32>
    %5 = arith.addf %2, %4 : vector<2x120xf32>
    %cst_5 = arith.constant 0.000000e+00 : f32
    %6 = vector.broadcast %cst_5 : f32 to vector<2x120xf32>
    %7 = arith.maximumf %5, %6 : vector<2x120xf32>
    %c0_6 = arith.constant 0 : index
    %c0_7 = arith.constant 0 : index
    %8 = vector.load %arg4[%c0_6, %c0_7] : memref<120x84xf32, #tpu.memory_space<vmem>>, vector<120x84xf32>
    %cst_8 = arith.constant dense<0.000000e+00> : vector<2x84xf32>
    %9 = tpu.matmul %7, %8, %cst_8 {dimension_numbers = #tpu.dot_dimension_numbers<[1], [0], [0], [1], [0, 0, 1, 1], [], []>} : vector<2x120xf32>, vector<120x84xf32>, vector<2x84xf32> -> vector<2x84xf32>
    %c0_9 = arith.constant 0 : index
    %c0_10 = arith.constant 0 : index
    %10 = vector.load %arg5[%c0_9, %c0_10] : memref<1x84xf32, #tpu.memory_space<vmem>>, vector<1x84xf32>
    %11 = vector.broadcast %10 : vector<1x84xf32> to vector<2x84xf32>
    %12 = arith.addf %9, %11 : vector<2x84xf32>
    %cst_11 = arith.constant 0.000000e+00 : f32
    %13 = vector.broadcast %cst_11 : f32 to vector<2x84xf32>
    %14 = arith.maximumf %12, %13 : vector<2x84xf32>
    %c0_12 = arith.constant 0 : index
    %c0_13 = arith.constant 0 : index
    %15 = vector.load %arg6[%c0_12, %c0_13] : memref<84x10xf32, #tpu.memory_space<vmem>>, vector<84x10xf32>
    %cst_14 = arith.constant dense<0.000000e+00> : vector<2x10xf32>
    %16 = tpu.matmul %14, %15, %cst_14 {dimension_numbers = #tpu.dot_dimension_numbers<[1], [0], [0], [1], [0, 0, 1, 1], [], []>} : vector<2x84xf32>, vector<84x10xf32>, vector<2x10xf32> -> vector<2x10xf32>
    %c0_15 = arith.constant 0 : index
    %c0_16 = arith.constant 0 : index
    %17 = vector.load %arg7[%c0_15, %c0_16] : memref<1x10xf32, #tpu.memory_space<vmem>>, vector<1x10xf32>
    %18 = vector.broadcast %17 : vector<1x10xf32> to vector<2x10xf32>
    %19 = arith.addf %16, %18 : vector<2x10xf32>
    %c0_17 = arith.constant 0 : index
    %c0_18 = arith.constant 0 : index
    %20 = vector.load %arg8[%c0_17, %c0_18] : memref<2x10xf32, #tpu.memory_space<vmem>>, vector<2x10xf32>
    tpu.vector_store %arg8[%c0_17, %c0_18], %19 {strides = array<i32>} : memref<2x10xf32, #tpu.memory_space<vmem>>, vector<2x10xf32>,
    return
  }
  func.func @transform_0(%arg0: i32) -> (i32, i32) {
    %c0_i32 = arith.constant 0 : i32
    %c0_i32_0 = arith.constant 0 : i32
    return %arg0, %c0_i32 : i32, i32
  }
  func.func @transform_1(%arg0: i32) -> (i32, i32) {
    %c0_i32 = arith.constant 0 : i32
    %c0_i32_0 = arith.constant 0 : i32
    %c0_i32_1 = arith.constant 0 : i32
    return %c0_i32, %c0_i32_0 : i32, i32
  }
  func.func @transform_2(%arg0: i32) -> (i32, i32) {
    %c0_i32 = arith.constant 0 : i32
    %c0_i32_0 = arith.constant 0 : i32
    %c0_i32_1 = arith.constant 0 : i32
    return %c0_i32, %c0_i32_0 : i32, i32
  }
  func.func @transform_3(%arg0: i32) -> (i32, i32) {
    %c0_i32 = arith.constant 0 : i32
    %c0_i32_0 = arith.constant 0 : i32
    %c0_i32_1 = arith.constant 0 : i32
    return %c0_i32, %c0_i32_0 : i32, i32
  }
  func.func @transform_4(%arg0: i32) -> (i32, i32) {
    %c0_i32 = arith.constant 0 : i32
    %c0_i32_0 = arith.constant 0 : i32
    %c0_i32_1 = arith.constant 0 : i32
    return %c0_i32, %c0_i32_0 : i32, i32
  }
  func.func @transform_5(%arg0: i32) -> (i32, i32) {
    %c0_i32 = arith.constant 0 : i32
    %c0_i32_0 = arith.constant 0 : i32
    %c0_i32_1 = arith.constant 0 : i32
    return %c0_i32, %c0_i32_0 : i32, i32
  }
  func.func @transform_6(%arg0: i32) -> (i32, i32) {
    %c0_i32 = arith.constant 0 : i32
    %c0_i32_0 = arith.constant 0 : i32
    %c0_i32_1 = arith.constant 0 : i32
    return %c0_i32, %c0_i32_0 : i32, i32
  }
  func.func @transform_7(%arg0: i32) -> (i32, i32) {
    %c0_i32 = arith.constant 0 : i32
    %c0_i32_0 = arith.constant 0 : i32
    return %arg0, %c0_i32 : i32, i32
  }
}

</mosaic_0001>

<llo_original>
// kernel: cnn_forward.3
$region0: #{cnn_forward.3}
  #allocation0 [shape = 'u32[]', space=smem, size = 0x4, offset = 0x4, fixed_abs, tag = 'smem constant byte address 0x4 - core index']
  #allocation1 [shape = 'u32[144,128]{1,0:T(1,128)}', space=vmem, size = 0x12000, scoped, tag = 'internal scratch']
  %s0 = inlined_call_operand.vmem [shape: f32[6,75], index: 0, kind: input, shape index: {}]
  %s1 = inlined_call_operand.vmem [shape: f32[6,1], index: 1, kind: input, shape index: {}]
  %s2 = inlined_call_operand.vmem [shape: f32[75,392], index: 2, kind: input, shape index: {}]
  %s3 = inlined_call_operand.vmem [shape: f32[75,392], index: 3, kind: input, shape index: {}]
  %s4 = inlined_call_operand.vmem [shape: f32[75,392], index: 4, kind: input, shape index: {}]
  %s5 = inlined_call_operand.vmem [shape: f32[75,392], index: 5, kind: input, shape index: {}]
  %s6 = inlined_call_operand.vmem [shape: f32[6,392], index: 6, kind: output, shape index: {}]
  %s7 = sld [smem:[#allocation0]]
  $region34: #{cnn_forward.3} parent=0
    _
  %s9 = ssub.s32 1, %s7
  %s10 = scalar_select 0, %s9, %s7
  // Predicated region
  $region2: #{cnn_forward.3} parent=0 // pred_check
    _
  $region3: #{cnn_forward.3} parent=0 // pred_check_branch
    %12 = sbr.rel (0) target = $region5
  $region4: #{cnn_forward.3} parent=0 // pred_region
    _
  $region5: #{cnn_forward.3} parent=0 // pred_fallthru
    _
  // Predicated region
  $region6: #{cnn_forward.3} parent=0 // pred_check
    _
  $region7: #{cnn_forward.3} parent=0 // pred_check_branch
    %14 = sbr.rel (0) target = $region9
  $region8: #{cnn_forward.3} parent=0 // pred_region
    _
  $region9: #{cnn_forward.3} parent=0 // pred_fallthru
    _
  // Predicated region
  $region10: #{cnn_forward.3} parent=0 // pred_check
    _
  $region11: #{cnn_forward.3} parent=0 // pred_check_branch
    %16 = sbr.rel (0) target = $region13
  $region12: #{cnn_forward.3} parent=0 // pred_region
    _
  $region13: #{cnn_forward.3} parent=0 // pred_fallthru
    _
  // Predicated region
  $region14: #{cnn_forward.3} parent=0 // pred_check
    _
  $region15: #{cnn_forward.3} parent=0 // pred_check_branch
    %18 = sbr.rel (0) target = $region17
  $region16: #{cnn_forward.3} parent=0 // pred_region
    _
  $region17: #{cnn_forward.3} parent=0 // pred_fallthru
    _
  // Predicated region
  $region18: #{cnn_forward.3} parent=0 // pred_check
    _
  $region19: #{cnn_forward.3} parent=0 // pred_check_branch
    %20 = sbr.rel (0) target = $region21
  $region20: #{cnn_forward.3} parent=0 // pred_region
    _
  $region21: #{cnn_forward.3} parent=0 // pred_fallthru
    _
  // Predicated region
  $region22: #{cnn_forward.3} parent=0 // pred_check
    _
  $region23: #{cnn_forward.3} parent=0 // pred_check_branch
    %22 = sbr.rel (0) target = $region25
  $region24: #{cnn_forward.3} parent=0 // pred_region
    _
  $region25: #{cnn_forward.3} parent=0 // pred_fallthru
    _
  %v23 = vld [vmem:[%s0] sm:$0x3f]
  %v24 = vld [vmem:[%s2] sm:$0xff]
  %v25 = vld [vmem:[%s2 + $0x8] sm:$0xff]
  %v26 = vld [vmem:[%s2 + $0x10] sm:$0xff]
  %v27 = vld [vmem:[%s2 + $0x18] sm:$0xff]
  %v28 = vld [vmem:[%s2 + $0x20] sm:$0xff]
  %v29 = vld [vmem:[%s2 + $0x28] sm:$0xff]
  %v30 = vld [vmem:[%s2 + $0x30] sm:$0xff]
  %v31 = vld [vmem:[%s2 + $0x38] sm:$0xff]
  %v32 = vld [vmem:[%s2 + $0x40] sm:$0xff]
  %v33 = vld [vmem:[%s2 + $0x48] sm:$0xff]
  %v34 = vld [vmem:[%s2 + $0x50] sm:$0xff]
  %v35 = vld [vmem:[%s2 + $0x58] sm:$0xff]
  %v36 = vld [vmem:[%s2 + $0x60] sm:$0xff]
  %v37 = vld [vmem:[%s2 + $0x68] sm:$0xff]
  %v38 = vld [vmem:[%s2 + $0x70] sm:$0xff]
  %v39 = vld [vmem:[%s2 + $0x78] sm:$0xff]
  %v40 = vld [vmem:[%s2 + $0x80] sm:$0xff]
  %v41 = vld [vmem:[%s2 + $0x88] sm:$0xff]
  %v42 = vld [vmem:[%s2 + $0x90] sm:$0xff]
  %v43 = vld [vmem:[%s2 + $0x98] sm:$0xff]
  %v44 = vld [vmem:[%s2 + $0xa0] sm:$0xff]
  %v45 = vld [vmem:[%s2 + $0xa8] sm:$0xff]
  %v46 = vld [vmem:[%s2 + $0xb0] sm:$0xff]
  %v47 = vld [vmem:[%s2 + $0xb8] sm:$0xff]
  %v48 = vld [vmem:[%s2 + $0xc0] sm:$0xff]
  %v49 = vld [vmem:[%s2 + $0xc8] sm:$0xff]
  %v50 = vld [vmem:[%s2 + $0xd0] sm:$0xff]
  %v51 = vld [vmem:[%s2 + $0xd8] sm:$0xff]
  %v52 = vld [vmem:[%s2 + $0xe0] sm:$0xff]
  %v53 = vld [vmem:[%s2 + $0xe8] sm:$0xff]
  %v54 = vld [vmem:[%s2 + $0xf0] sm:$0xff]
  %v55 = vld [vmem:[%s2 + $0xf8] sm:$0xff]
  %v56 = vld [vmem:[%s2 + $0x100] sm:$0xff]
  %v57 = vld [vmem:[%s2 + $0x108] sm:$0xff]
  %v58 = vld [vmem:[%s2 + $0x110] sm:$0xff]
  %v59 = vld [vmem:[%s2 + $0x118] sm:$0xff]
  %v60 = vld [vmem:[%s2 + $0x120] sm:$0x7]
  %v61 = vld [vmem:[%s2 + $0x128] sm:$0x7]
  %v62 = vld [vmem:[%s2 + $0x130] sm:$0x7]
  %v63 = vld [vmem:[%s2 + $0x138] sm:$0x7]
  %vm64 = vcmask 613376
  %v66 = vsel %vm64, %v23, 0
  %vm68 = vcmask 1042432
  %v70 = vsel %vm68, %v60, 0
  %v73 = vsel %vm68, %v61, 0
  %v76 = vsel %vm68, %v62, 0
  %v79 = vsel %vm68, %v63, 0
  %81 = vmatprep.subr.mxu0 %v25
  %82 = vmatpush1.msra.mxu0 %v24
  %83 = vmatprep.subr.mxu0 %v29
  %84 = vmatpush1.msra.mxu0 %v28
  %85 = vmatprep.subr.mxu0 %v33
  %86 = vmatpush1.msra.mxu0 %v32
  %87 = vmatprep.subr.mxu0 %v37
  %88 = vmatpush1.msra.mxu0 %v36
  %89 = vmatprep.subr.mxu0 %v41
  %90 = vmatpush1.msra.mxu0 %v40
  %91 = vmatprep.subr.mxu0 %v45
  %92 = vmatpush1.msra.mxu0 %v44
  %93 = vmatprep.subr.mxu0 %v49
  %94 = vmatpush1.msra.mxu0 %v48
  %95 = vmatprep.subr.mxu0 %v53
  %96 = vmatpush1.msra.mxu0 %v52
  %97 = vmatprep.subr.mxu0 %v57
  %98 = vmatpush1.msra.mxu0 %v56
  %99 = vmatprep.subr.mxu0 %v73
  %100 = vmatpush1.msra.mxu0 %v70
  %101 = vmatprep.subr.mxu0 0.0
  %102 = vmatpush1.msra.mxu0 0.0
  %103 = vmatprep.subr.mxu0 0.0
  %104 = vmatpush1.msra.mxu0 0.0
  %105 = vmatprep.subr.mxu0 0.0
  %106 = vmatpush1.msra.mxu0 0.0
  %107 = vmatprep.subr.mxu0 0.0
  %108 = vmatpush1.msra.mxu0 0.0
  %109 = vmatprep.subr.mxu0 0.0
  %110 = vmatpush1.msra.mxu0 0.0
  %111 = vmatprep.subr.mxu0 0.0
  %112 = vmatpush1.msra.mxu0 0.0
  %113 = vmatprep.subr.mxu0 0.0
  %114 = vmatpush1.msra.mxu0 0.0
  %115 = vmatprep.subr.mxu0 0.0
  %116 = vmatpush1.msra.mxu0 0.0
  %117 = vmatprep.subr.mxu0 0.0
  %118 = vmatpush1.msra.mxu0 0.0
  %119 = vmatprep.subr.mxu0 0.0
  %120 = vmatpush1.msra.mxu0 0.0
  %121 = vmatprep.subr.mxu0 0.0
  %122 = vmatpush1.msra.mxu0 0.0
  %123 = vmatprep.subr.mxu0 0.0
  %124 = vmatpush1.msra.mxu0 0.0
  %125 = vmatprep.subr.mxu0 0.0
  %126 = vmatpush1.msra.mxu0 0.0
  %127 = vmatprep.subr.mxu0 0.0
  %128 = vmatpush1.msra.mxu0 0.0
  %129 = vmatprep.subr.mxu0 0.0
  %130 = vmatpush1.msra.mxu0 0.0
  %131 = vmatprep.subr.mxu0 0.0
  %132 = vmatpush1.msra.mxu0 0.0
  %133 = vmatprep.subr.mxu0 0.0
  %134 = vmatpush1.msra.mxu0 0.0
  %135 = vmatprep.subr.mxu0 0.0
  %136 = vmatpush1.msra.mxu0 0.0
  %137 = vmatprep.subr.mxu0 0.0
  %138 = vmatpush1.msra.mxu0 0.0
  %139 = vmatprep.subr.mxu0 0.0
  %140 = vmatpush1.msra.mxu0 0.0
  %141 = vmatprep.subr.mxu0 0.0
  %142 = vmatpush1.msra.mxu0 0.0
  %143 = vmatprep.subr.mxu0 0.0
  %144 = vmatpush1.msra.mxu0 0.0
  %145 = vmatprep.mubr.f32.mxu0 0.0
  %146 = vmatmul.mubr.f32.gmra.mrb[0].mxu0 %v66
  %v147 = vpop.f32.mrb[0].mxu0
  %v148 = vadd.f32 0.0, %v147
  %v149 = vpop.f32.mrb[0].mxu0
  %v150 = vadd.f32 0.0, %v149
  %151 = vdwg.mxu0
  %152 = vmatprep.subr.mxu0 %v27
  %153 = vmatpush1.msra.mxu0 %v26
  %154 = vmatprep.subr.mxu0 %v31
  %155 = vmatpush1.msra.mxu0 %v30
  %156 = vmatprep.subr.mxu0 %v35
  %157 = vmatpush1.msra.mxu0 %v34
  %158 = vmatprep.subr.mxu0 %v39
  %159 = vmatpush1.msra.mxu0 %v38
  %160 = vmatprep.subr.mxu0 %v43
  %161 = vmatpush1.msra.mxu0 %v42
  %162 = vmatprep.subr.mxu0 %v47
  %163 = vmatpush1.msra.mxu0 %v46
  %164 = vmatprep.subr.mxu0 %v51
  %165 = vmatpush1.msra.mxu0 %v50
  %166 = vmatprep.subr.mxu0 %v55
  %167 = vmatpush1.msra.mxu0 %v54
  %168 = vmatprep.subr.mxu0 %v59
  %169 = vmatpush1.msra.mxu0 %v58
  %170 = vmatprep.subr.mxu0 %v79
  %171 = vmatpush1.msra.mxu0 %v76
  %172 = vmatprep.subr.mxu0 0.0
  %173 = vmatpush1.msra.mxu0 0.0
  %174 = vmatprep.subr.mxu0 0.0
  %175 = vmatpush1.msra.mxu0 0.0
  %176 = vmatprep.subr.mxu0 0.0
  %177 = vmatpush1.msra.mxu0 0.0
  %178 = vmatprep.subr.mxu0 0.0
  %179 = vmatpush1.msra.mxu0 0.0
  %180 = vmatprep.subr.mxu0 0.0
  %181 = vmatpush1.msra.mxu0 0.0
  %182 = vmatprep.subr.mxu0 0.0
  %183 = vmatpush1.msra.mxu0 0.0
  %184 = vmatprep.subr.mxu0 0.0
  %185 = vmatpush1.msra.mxu0 0.0
  %186 = vmatprep.subr.mxu0 0.0
  %187 = vmatpush1.msra.mxu0 0.0
  %188 = vmatprep.subr.mxu0 0.0
  %189 = vmatpush1.msra.mxu0 0.0
  %190 = vmatprep.subr.mxu0 0.0
  %191 = vmatpush1.msra.mxu0 0.0
  %192 = vmatprep.subr.mxu0 0.0
  %193 = vmatpush1.msra.mxu0 0.0
  %194 = vmatprep.subr.mxu0 0.0
  %195 = vmatpush1.msra.mxu0 0.0
  %196 = vmatprep.subr.mxu0 0.0
  %197 = vmatpush1.msra.mxu0 0.0
  %198 = vmatprep.subr.mxu0 0.0
  %199 = vmatpush1.msra.mxu0 0.0
  %200 = vmatprep.subr.mxu0 0.0
  %201 = vmatpush1.msra.mxu0 0.0
  %202 = vmatprep.subr.mxu0 0.0
  %203 = vmatpush1.msra.mxu0 0.0
  %204 = vmatprep.subr.mxu0 0.0
  %205 = vmatpush1.msra.mxu0 0.0
  %206 = vmatprep.subr.mxu0 0.0
  %207 = vmatpush1.msra.mxu0 0.0
  %208 = vmatprep.subr.mxu0 0.0
  %209 = vmatpush1.msra.mxu0 0.0
  %210 = vmatprep.subr.mxu0 0.0
  %211 = vmatpush1.msra.mxu0 0.0
  %212 = vmatprep.subr.mxu0 0.0
  %213 = vmatpush1.msra.mxu0 0.0
  %214 = vmatprep.subr.mxu0 0.0
  %215 = vmatpush1.msra.mxu0 0.0
  %216 = vmatprep.mubr.f32.mxu0 0.0
  %217 = vmatmul.mubr.f32.gmra.mrb[0].mxu0 %v66
  %v218 = vpop.f32.mrb[0].mxu0
  %v219 = vadd.f32 0.0, %v218
  %v220 = vpop.f32.mrb[0].mxu0
  %v221 = vadd.f32 0.0, %v220
  %222 = vdwg.mxu0
  %v223 = vld [vmem:[%s3] sm:$0xff]
  %v224 = vld [vmem:[%s3 + $0x8] sm:$0xff]
  %v225 = vld [vmem:[%s3 + $0x10] sm:$0xff]
  %v226 = vld [vmem:[%s3 + $0x18] sm:$0xff]
  %v227 = vld [vmem:[%s3 + $0x20] sm:$0xff]
  %v228 = vld [vmem:[%s3 + $0x28] sm:$0xff]
  %v229 = vld [vmem:[%s3 + $0x30] sm:$0xff]
  %v230 = vld [vmem:[%s3 + $0x38] sm:$0xff]
  %v231 = vld [vmem:[%s3 + $0x40] sm:$0xff]
  %v232 = vld [vmem:[%s3 + $0x48] sm:$0xff]
  %v233 = vld [vmem:[%s3 + $0x50] sm:$0xff]
  %v234 = vld [vmem:[%s3 + $0x58] sm:$0xff]
  %v235 = vld [vmem:[%s3 + $0x60] sm:$0xff]
  %v236 = vld [vmem:[%s3 + $0x68] sm:$0xff]
  %v237 = vld [vmem:[%s3 + $0x70] sm:$0xff]
  %v238 = vld [vmem:[%s3 + $0x78] sm:$0xff]
  %v239 = vld [vmem:[%s3 + $0x80] sm:$0xff]
  %v240 = vld [vmem:[%s3 + $0x88] sm:$0xff]
  %v241 = vld [vmem:[%s3 + $0x90] sm:$0xff]
  %v242 = vld [vmem:[%s3 + $0x98] sm:$0xff]
  %v243 = vld [vmem:[%s3 + $0xa0] sm:$0xff]
  %v244 = vld [vmem:[%s3 + $0xa8] sm:$0xff]
  %v245 = vld [vmem:[%s3 + $0xb0] sm:$0xff]
  %v246 = vld [vmem:[%s3 + $0xb8] sm:$0xff]
  %v247 = vld [vmem:[%s3 + $0xc0] sm:$0xff]
  %v248 = vld [vmem:[%s3 + $0xc8] sm:$0xff]
  %v249 = vld [vmem:[%s3 + $0xd0] sm:$0xff]
  %v250 = vld [vmem:[%s3 + $0xd8] sm:$0xff]
  %v251 = vld [vmem:[%s3 + $0xe0] sm:$0xff]
  %v252 = vld [vmem:[%s3 + $0xe8] sm:$0xff]
  %v253 = vld [vmem:[%s3 + $0xf0] sm:$0xff]
  %v254 = vld [vmem:[%s3 + $0xf8] sm:$0xff]
  %v255 = vld [vmem:[%s3 + $0x100] sm:$0xff]
  %v256 = vld [vmem:[%s3 + $0x108] sm:$0xff]
  %v257 = vld [vmem:[%s3 + $0x110] sm:$0xff]
  %v258 = vld [vmem:[%s3 + $0x118] sm:$0xff]
  %v259 = vld [vmem:[%s3 + $0x120] sm:$0x7]
  %v260 = vld [vmem:[%s3 + $0x128] sm:$0x7]
  %v261 = vld [vmem:[%s3 + $0x130] sm:$0x7]
  %v262 = vld [vmem:[%s3 + $0x138] sm:$0x7]
  %v264 = vsel %vm68, %v259, 0
  %v267 = vsel %vm68, %v260, 0
  %v270 = vsel %vm68, %v261, 0
  %v273 = vsel %vm68, %v262, 0
  %275 = vmatprep.subr.mxu0 %v224
  %276 = vmatpush1.msra.mxu0 %v223
  %277 = vmatprep.subr.mxu0 %v228
  %278 = vmatpush1.msra.mxu0 %v227
  %279 = vmatprep.subr.mxu0 %v232
  %280 = vmatpush1.msra.mxu0 %v231
  %281 = vmatprep.subr.mxu0 %v236
  %282 = vmatpush1.msra.mxu0 %v235
  %283 = vmatprep.subr.mxu0 %v240
  %284 = vmatpush1.msra.mxu0 %v239
  %285 = vmatprep.subr.mxu0 %v244
  %286 = vmatpush1.msra.mxu0 %v243
  %287 = vmatprep.subr.mxu0 %v248
  %288 = vmatpush1.msra.mxu0 %v247
  %289 = vmatprep.subr.mxu0 %v252
  %290 = vmatpush1.msra.mxu0 %v251
  %291 = vmatprep.subr.mxu0 %v256
  %292 = vmatpush1.msra.mxu0 %v255
  %293 = vmatprep.subr.mxu0 %v267
  %294 = vmatpush1.msra.mxu0 %v264
  %295 = vmatprep.subr.mxu0 0.0
  %296 = vmatpush1.msra.mxu0 0.0
  %297 = vmatprep.subr.mxu0 0.0
  %298 = vmatpush1.msra.mxu0 0.0
  %299 = vmatprep.subr.mxu0 0.0
  %300 = vmatpush1.msra.mxu0 0.0
  %301 = vmatprep.subr.mxu0 0.0
  %302 = vmatpush1.msra.mxu0 0.0
  %303 = vmatprep.subr.mxu0 0.0
  %304 = vmatpush1.msra.mxu0 0.0
  %305 = vmatprep.subr.mxu0 0.0
  %306 = vmatpush1.msra.mxu0 0.0
  %307 = vmatprep.subr.mxu0 0.0
  %308 = vmatpush1.msra.mxu0 0.0
  %309 = vmatprep.subr.mxu0 0.0
  %310 = vmatpush1.msra.mxu0 0.0
  %311 = vmatprep.subr.mxu0 0.0
  %312 = vmatpush1.msra.mxu0 0.0
  %313 = vmatprep.subr.mxu0 0.0
  %314 = vmatpush1.msra.mxu0 0.0
  %315 = vmatprep.subr.mxu0 0.0
  %316 = vmatpush1.msra.mxu0 0.0
  %317 = vmatprep.subr.mxu0 0.0
  %318 = vmatpush1.msra.mxu0 0.0
  %319 = vmatprep.subr.mxu0 0.0
  %320 = vmatpush1.msra.mxu0 0.0
  %321 = vmatprep.subr.mxu0 0.0
  %322 = vmatpush1.msra.mxu0 0.0
  %323 = vmatprep.subr.mxu0 0.0
  %324 = vmatpush1.msra.mxu0 0.0
  %325 = vmatprep.subr.mxu0 0.0
  %326 = vmatpush1.msra.mxu0 0.0
  %327 = vmatprep.subr.mxu0 0.0
  %328 = vmatpush1.msra.mxu0 0.0
  %329 = vmatprep.subr.mxu0 0.0
  %330 = vmatpush1.msra.mxu0 0.0
  %331 = vmatprep.subr.mxu0 0.0
  %332 = vmatpush1.msra.mxu0 0.0
  %333 = vmatprep.subr.mxu0 0.0
  %334 = vmatpush1.msra.mxu0 0.0
  %335 = vmatprep.subr.mxu0 0.0
  %336 = vmatpush1.msra.mxu0 0.0
  %337 = vmatprep.subr.mxu0 0.0
  %338 = vmatpush1.msra.mxu0 0.0
  %339 = vmatprep.mubr.f32.mxu0 0.0
  %340 = vmatmul.mubr.f32.gmra.mrb[0].mxu0 %v66
  %v341 = vpop.f32.mrb[0].mxu0
  %v342 = vadd.f32 0.0, %v341
  %v343 = vpop.f32.mrb[0].mxu0
  %v344 = vadd.f32 0.0, %v343
  %345 = vdwg.mxu0
  %346 = vmatprep.subr.mxu0 %v226
  %347 = vmatpush1.msra.mxu0 %v225
  %348 = vmatprep.subr.mxu0 %v230
  %349 = vmatpush1.msra.mxu0 %v229
  %350 = vmatprep.subr.mxu0 %v234
  %351 = vmatpush1.msra.mxu0 %v233
  %352 = vmatprep.subr.mxu0 %v238
  %353 = vmatpush1.msra.mxu0 %v237
  %354 = vmatprep.subr.mxu0 %v242
  %355 = vmatpush1.msra.mxu0 %v241
  %356 = vmatprep.subr.mxu0 %v246
  %357 = vmatpush1.msra.mxu0 %v245
  %358 = vmatprep.subr.mxu0 %v250
  %359 = vmatpush1.msra.mxu0 %v249
  %360 = vmatprep.subr.mxu0 %v254
  %361 = vmatpush1.msra.mxu0 %v253
  %362 = vmatprep.subr.mxu0 %v258
  %363 = vmatpush1.msra.mxu0 %v257
  %364 = vmatprep.subr.mxu0 %v273
  %365 = vmatpush1.msra.mxu0 %v270
  %366 = vmatprep.subr.mxu0 0.0
  %367 = vmatpush1.msra.mxu0 0.0
  %368 = vmatprep.subr.mxu0 0.0
  %369 = vmatpush1.msra.mxu0 0.0
  %370 = vmatprep.subr.mxu0 0.0
  %371 = vmatpush1.msra.mxu0 0.0
  %372 = vmatprep.subr.mxu0 0.0
  %373 = vmatpush1.msra.mxu0 0.0
  %374 = vmatprep.subr.mxu0 0.0
  %375 = vmatpush1.msra.mxu0 0.0
  %376 = vmatprep.subr.mxu0 0.0
  %377 = vmatpush1.msra.mxu0 0.0
  %378 = vmatprep.subr.mxu0 0.0
  %379 = vmatpush1.msra.mxu0 0.0
  %380 = vmatprep.subr.mxu0 0.0
  %381 = vmatpush1.msra.mxu0 0.0
  %382 = vmatprep.subr.mxu0 0.0
  %383 = vmatpush1.msra.mxu0 0.0
  %384 = vmatprep.subr.mxu0 0.0
  %385 = vmatpush1.msra.mxu0 0.0
  %386 = vmatprep.subr.mxu0 0.0
  %387 = vmatpush1.msra.mxu0 0.0
  %388 = vmatprep.subr.mxu0 0.0
  %389 = vmatpush1.msra.mxu0 0.0
  %390 = vmatprep.subr.mxu0 0.0
  %391 = vmatpush1.msra.mxu0 0.0
  %392 = vmatprep.subr.mxu0 0.0
  %393 = vmatpush1.msra.mxu0 0.0
  %394 = vmatprep.subr.mxu0 0.0
  %395 = vmatpush1.msra.mxu0 0.0
  %396 = vmatprep.subr.mxu0 0.0
  %397 = vmatpush1.msra.mxu0 0.0
  %398 = vmatprep.subr.mxu0 0.0
  %399 = vmatpush1.msra.mxu0 0.0
  %400 = vmatprep.subr.mxu0 0.0
  %401 = vmatpush1.msra.mxu0 0.0
  %402 = vmatprep.subr.mxu0 0.0
  %403 = vmatpush1.msra.mxu0 0.0
  %404 = vmatprep.subr.mxu0 0.0
  %405 = vmatpush1.msra.mxu0 0.0
  %406 = vmatprep.subr.mxu0 0.0
  %407 = vmatpush1.msra.mxu0 0.0
  %408 = vmatprep.subr.mxu0 0.0
  %409 = vmatpush1.msra.mxu0 0.0
  %410 = vmatprep.mubr.f32.mxu0 0.0
  %411 = vmatmul.mubr.f32.gmra.mrb[0].mxu0 %v66
  %v412 = vpop.f32.mrb[0].mxu0
  %v413 = vadd.f32 0.0, %v412
  %v414 = vpop.f32.mrb[0].mxu0
  %v415 = vadd.f32 0.0, %v414
  %416 = vdwg.mxu0
  %v417 = vmax.f32 %v148, %v342
  %v418 = vmax.f32 %v150, %v344
  %v419 = vmax.f32 %v219, %v413
  %v420 = vmax.f32 %v221, %v415
  %v421 = vld [vmem:[%s4] sm:$0xff]
  %v422 = vld [vmem:[%s4 + $0x8] sm:$0xff]
  %v423 = vld [vmem:[%s4 + $0x10] sm:$0xff]
  %v424 = vld [vmem:[%s4 + $0x18] sm:$0xff]
  %v425 = vld [vmem:[%s4 + $0x20] sm:$0xff]
  %v426 = vld [vmem:[%s4 + $0x28] sm:$0xff]
  %v427 = vld [vmem:[%s4 + $0x30] sm:$0xff]
  %v428 = vld [vmem:[%s4 + $0x38] sm:$0xff]
  %v429 = vld [vmem:[%s4 + $0x40] sm:$0xff]
  %v430 = vld [vmem:[%s4 + $0x48] sm:$0xff]
  %v431 = vld [vmem:[%s4 + $0x50] sm:$0xff]
  %v432 = vld [vmem:[%s4 + $0x58] sm:$0xff]
  %v433 = vld [vmem:[%s4 + $0x60] sm:$0xff]
  %v434 = vld [vmem:[%s4 + $0x68] sm:$0xff]
  %v435 = vld [vmem:[%s4 + $0x70] sm:$0xff]
  %v436 = vld [vmem:[%s4 + $0x78] sm:$0xff]
  %v437 = vld [vmem:[%s4 + $0x80] sm:$0xff]
  %v438 = vld [vmem:[%s4 + $0x88] sm:$0xff]
  %v439 = vld [vmem:[%s4 + $0x90] sm:$0xff]
  %v440 = vld [vmem:[%s4 + $0x98] sm:$0xff]
  %v441 = vld [vmem:[%s4 + $0xa0] sm:$0xff]
  %v442 = vld [vmem:[%s4 + $0xa8] sm:$0xff]
  %v443 = vld [vmem:[%s4 + $0xb0] sm:$0xff]
  %v444 = vld [vmem:[%s4 + $0xb8] sm:$0xff]
  %v445 = vld [vmem:[%s4 + $0xc0] sm:$0xff]
  %v446 = vld [vmem:[%s4 + $0xc8] sm:$0xff]
  %v447 = vld [vmem:[%s4 + $0xd0] sm:$0xff]
  %v448 = vld [vmem:[%s4 + $0xd8] sm:$0xff]
  %v449 = vld [vmem:[%s4 + $0xe0] sm:$0xff]
  %v450 = vld [vmem:[%s4 + $0xe8] sm:$0xff]
  %v451 = vld [vmem:[%s4 + $0xf0] sm:$0xff]
  %v452 = vld [vmem:[%s4 + $0xf8] sm:$0xff]
  %v453 = vld [vmem:[%s4 + $0x100] sm:$0xff]
  %v454 = vld [vmem:[%s4 + $0x108] sm:$0xff]
  %v455 = vld [vmem:[%s4 + $0x110] sm:$0xff]
  %v456 = vld [vmem:[%s4 + $0x118] sm:$0xff]
  %v457 = vld [vmem:[%s4 + $0x120] sm:$0x7]
  %v458 = vld [vmem:[%s4 + $0x128] sm:$0x7]
  %v459 = vld [vmem:[%s4 + $0x130] sm:$0x7]
  %v460 = vld [vmem:[%s4 + $0x138] sm:$0x7]
  %v462 = vsel %vm68, %v457, 0
  %v465 = vsel %vm68, %v458, 0
  %v468 = vsel %vm68, %v459, 0
  %v471 = vsel %vm68, %v460, 0
  %473 = vmatprep.subr.mxu0 %v422
  %474 = vmatpush1.msra.mxu0 %v421
  %475 = vmatprep.subr.mxu0 %v426
  %476 = vmatpush1.msra.mxu0 %v425
  %477 = vmatprep.subr.mxu0 %v430
  %478 = vmatpush1.msra.mxu0 %v429
  %479 = vmatprep.subr.mxu0 %v434
  %480 = vmatpush1.msra.mxu0 %v433
  %481 = vmatprep.subr.mxu0 %v438
  %482 = vmatpush1.msra.mxu0 %v437
  %483 = vmatprep.subr.mxu0 %v442
  %484 = vmatpush1.msra.mxu0 %v441
  %485 = vmatprep.subr.mxu0 %v446
  %486 = vmatpush1.msra.mxu0 %v445
  %487 = vmatprep.subr.mxu0 %v450
  %488 = vmatpush1.msra.mxu0 %v449
  %489 = vmatprep.subr.mxu0 %v454
  %490 = vmatpush1.msra.mxu0 %v453
  %491 = vmatprep.subr.mxu0 %v465
  %492 = vmatpush1.msra.mxu0 %v462
  %493 = vmatprep.subr.mxu0 0.0
  %494 = vmatpush1.msra.mxu0 0.0
  %495 = vmatprep.subr.mxu0 0.0
  %496 = vmatpush1.msra.mxu0 0.0
  %497 = vmatprep.subr.mxu0 0.0
  %498 = vmatpush1.msra.mxu0 0.0
  %499 = vmatprep.subr.mxu0 0.0
  %500 = vmatpush1.msra.mxu0 0.0
  %501 = vmatprep.subr.mxu0 0.0
  %502 = vmatpush1.msra.mxu0 0.0
  %503 = vmatprep.subr.mxu0 0.0
  %504 = vmatpush1.msra.mxu0 0.0
  %505 = vmatprep.subr.mxu0 0.0
  %506 = vmatpush1.msra.mxu0 0.0
  %507 = vmatprep.subr.mxu0 0.0
  %508 = vmatpush1.msra.mxu0 0.0
  %509 = vmatprep.subr.mxu0 0.0
  %510 = vmatpush1.msra.mxu0 0.0
  %511 = vmatprep.subr.mxu0 0.0
  %512 = vmatpush1.msra.mxu0 0.0
  %513 = vmatprep.subr.mxu0 0.0
  %514 = vmatpush1.msra.mxu0 0.0
  %515 = vmatprep.subr.mxu0 0.0
  %516 = vmatpush1.msra.mxu0 0.0
  %517 = vmatprep.subr.mxu0 0.0
  %518 = vmatpush1.msra.mxu0 0.0
  %519 = vmatprep.subr.mxu0 0.0
  %520 = vmatpush1.msra.mxu0 0.0
  %521 = vmatprep.subr.mxu0 0.0
  %522 = vmatpush1.msra.mxu0 0.0
  %523 = vmatprep.subr.mxu0 0.0
  %524 = vmatpush1.msra.mxu0 0.0
  %525 = vmatprep.subr.mxu0 0.0
  %526 = vmatpush1.msra.mxu0 0.0
  %527 = vmatprep.subr.mxu0 0.0
  %528 = vmatpush1.msra.mxu0 0.0
  %529 = vmatprep.subr.mxu0 0.0
  %530 = vmatpush1.msra.mxu0 0.0
  %531 = vmatprep.subr.mxu0 0.0
  %532 = vmatpush1.msra.mxu0 0.0
  %533 = vmatprep.subr.mxu0 0.0
  %534 = vmatpush1.msra.mxu0 0.0
  %535 = vmatprep.subr.mxu0 0.0
  %536 = vmatpush1.msra.mxu0 0.0
  %537 = vmatprep.mubr.f32.mxu0 0.0
  %538 = vmatmul.mubr.f32.gmra.mrb[0].mxu0 %v66
  %v539 = vpop.f32.mrb[0].mxu0
  %v540 = vadd.f32 0.0, %v539
  %v541 = vpop.f32.mrb[0].mxu0
  %v542 = vadd.f32 0.0, %v541
  %543 = vdwg.mxu0
  %544 = vmatprep.subr.mxu0 %v424
  %545 = vmatpush1.msra.mxu0 %v423
  %546 = vmatprep.subr.mxu0 %v428
  %547 = vmatpush1.msra.mxu0 %v427
  %548 = vmatprep.subr.mxu0 %v432
  %549 = vmatpush1.msra.mxu0 %v431
  %550 = vmatprep.subr.mxu0 %v436
  %551 = vmatpush1.msra.mxu0 %v435
  %552 = vmatprep.subr.mxu0 %v440
  %553 = vmatpush1.msra.mxu0 %v439
  %554 = vmatprep.subr.mxu0 %v444
  %555 = vmatpush1.msra.mxu0 %v443
  %556 = vmatprep.subr.mxu0 %v448
  %557 = vmatpush1.msra.mxu0 %v447
  %558 = vmatprep.subr.mxu0 %v452
  %559 = vmatpush1.msra.mxu0 %v451
  %560 = vmatprep.subr.mxu0 %v456
  %561 = vmatpush1.msra.mxu0 %v455
  %562 = vmatprep.subr.mxu0 %v471
  %563 = vmatpush1.msra.mxu0 %v468
  %564 = vmatprep.subr.mxu0 0.0
  %565 = vmatpush1.msra.mxu0 0.0
  %566 = vmatprep.subr.mxu0 0.0
  %567 = vmatpush1.msra.mxu0 0.0
  %568 = vmatprep.subr.mxu0 0.0
  %569 = vmatpush1.msra.mxu0 0.0
  %570 = vmatprep.subr.mxu0 0.0
  %571 = vmatpush1.msra.mxu0 0.0
  %572 = vmatprep.subr.mxu0 0.0
  %573 = vmatpush1.msra.mxu0 0.0
  %574 = vmatprep.subr.mxu0 0.0
  %575 = vmatpush1.msra.mxu0 0.0
  %576 = vmatprep.subr.mxu0 0.0
  %577 = vmatpush1.msra.mxu0 0.0
  %578 = vmatprep.subr.mxu0 0.0
  %579 = vmatpush1.msra.mxu0 0.0
  %580 = vmatprep.subr.mxu0 0.0
  %581 = vmatpush1.msra.mxu0 0.0
  %582 = vmatprep.subr.mxu0 0.0
  %583 = vmatpush1.msra.mxu0 0.0
  %584 = vmatprep.subr.mxu0 0.0
  %585 = vmatpush1.msra.mxu0 0.0
  %586 = vmatprep.subr.mxu0 0.0
  %587 = vmatpush1.msra.mxu0 0.0
  %588 = vmatprep.subr.mxu0 0.0
  %589 = vmatpush1.msra.mxu0 0.0
  %590 = vmatprep.subr.mxu0 0.0
  %591 = vmatpush1.msra.mxu0 0.0
  %592 = vmatprep.subr.mxu0 0.0
  %593 = vmatpush1.msra.mxu0 0.0
  %594 = vmatprep.subr.mxu0 0.0
  %595 = vmatpush1.msra.mxu0 0.0
  %596 = vmatprep.subr.mxu0 0.0
  %597 = vmatpush1.msra.mxu0 0.0
  %598 = vmatprep.subr.mxu0 0.0
  %599 = vmatpush1.msra.mxu0 0.0
  %600 = vmatprep.subr.mxu0 0.0
  %601 = vmatpush1.msra.mxu0 0.0
  %602 = vmatprep.subr.mxu0 0.0
  %603 = vmatpush1.msra.mxu0 0.0
  %604 = vmatprep.subr.mxu0 0.0
  %605 = vmatpush1.msra.mxu0 0.0
  %606 = vmatprep.subr.mxu0 0.0
  %607 = vmatpush1.msra.mxu0 0.0
  %608 = vmatprep.mubr.f32.mxu0 0.0
  %609 = vmatmul.mubr.f32.gmra.mrb[0].mxu0 %v66
  %v610 = vpop.f32.mrb[0].mxu0
  %v611 = vadd.f32 0.0, %v610
  %v612 = vpop.f32.mrb[0].mxu0
  %v613 = vadd.f32 0.0, %v612
  %614 = vdwg.mxu0
  %v615 = vld [vmem:[%s5] sm:$0xff]
  %v616 = vld [vmem:[%s5 + $0x8] sm:$0xff]
  %v617 = vld [vmem:[%s5 + $0x10] sm:$0xff]
  %v618 = vld [vmem:[%s5 + $0x18] sm:$0xff]
  %v619 = vld [vmem:[%s5 + $0x20] sm:$0xff]
  %v620 = vld [vmem:[%s5 + $0x28] sm:$0xff]
  %v621 = vld [vmem:[%s5 + $0x30] sm:$0xff]
  %v622 = vld [vmem:[%s5 + $0x38] sm:$0xff]
  %v623 = vld [vmem:[%s5 + $0x40] sm:$0xff]
  %v624 = vld [vmem:[%s5 + $0x48] sm:$0xff]
  %v625 = vld [vmem:[%s5 + $0x50] sm:$0xff]
  %v626 = vld [vmem:[%s5 + $0x58] sm:$0xff]
  %v627 = vld [vmem:[%s5 + $0x60] sm:$0xff]
  %v628 = vld [vmem:[%s5 + $0x68] sm:$0xff]
  %v629 = vld [vmem:[%s5 + $0x70] sm:$0xff]
  %v630 = vld [vmem:[%s5 + $0x78] sm:$0xff]
  %v631 = vld [vmem:[%s5 + $0x80] sm:$0xff]
  %v632 = vld [vmem:[%s5 + $0x88] sm:$0xff]
  %v633 = vld [vmem:[%s5 + $0x90] sm:$0xff]
  %v634 = vld [vmem:[%s5 + $0x98] sm:$0xff]
  %v635 = vld [vmem:[%s5 + $0xa0] sm:$0xff]
  %v636 = vld [vmem:[%s5 + $0xa8] sm:$0xff]
  %v637 = vld [vmem:[%s5 + $0xb0] sm:$0xff]
  %v638 = vld [vmem:[%s5 + $0xb8] sm:$0xff]
  %v639 = vld [vmem:[%s5 + $0xc0] sm:$0xff]
  %v640 = vld [vmem:[%s5 + $0xc8] sm:$0xff]
  %v641 = vld [vmem:[%s5 + $0xd0] sm:$0xff]
  %v642 = vld [vmem:[%s5 + $0xd8] sm:$0xff]
  %v643 = vld [vmem:[%s5 + $0xe0] sm:$0xff]
  %v644 = vld [vmem:[%s5 + $0xe8] sm:$0xff]
  %v645 = vld [vmem:[%s5 + $0xf0] sm:$0xff]
  %v646 = vld [vmem:[%s5 + $0xf8] sm:$0xff]
  %v647 = vld [vmem:[%s5 + $0x100] sm:$0xff]
  %v648 = vld [vmem:[%s5 + $0x108] sm:$0xff]
  %v649 = vld [vmem:[%s5 + $0x110] sm:$0xff]
  %v650 = vld [vmem:[%s5 + $0x118] sm:$0xff]
  %v651 = vld [vmem:[%s5 + $0x120] sm:$0x7]
  %v652 = vld [vmem:[%s5 + $0x128] sm:$0x7]
  %v653 = vld [vmem:[%s5 + $0x130] sm:$0x7]
  %v654 = vld [vmem:[%s5 + $0x138] sm:$0x7]
  %v656 = vsel %vm68, %v651, 0
  %v659 = vsel %vm68, %v652, 0
  %v662 = vsel %vm68, %v653, 0
  %v665 = vsel %vm68, %v654, 0
  %667 = vmatprep.subr.mxu0 %v616
  %668 = vmatpush1.msra.mxu0 %v615
  %669 = vmatprep.subr.mxu0 %v620
  %670 = vmatpush1.msra.mxu0 %v619
  %671 = vmatprep.subr.mxu0 %v624
  %672 = vmatpush1.msra.mxu0 %v623
  %673 = vmatprep.subr.mxu0 %v628
  %674 = vmatpush1.msra.mxu0 %v627
  %675 = vmatprep.subr.mxu0 %v632
  %676 = vmatpush1.msra.mxu0 %v631
  %677 = vmatprep.subr.mxu0 %v636
  %678 = vmatpush1.msra.mxu0 %v635
  %679 = vmatprep.subr.mxu0 %v640
  %680 = vmatpush1.msra.mxu0 %v639
  %681 = vmatprep.subr.mxu0 %v644
  %682 = vmatpush1.msra.mxu0 %v643
  %683 = vmatprep.subr.mxu0 %v648
  %684 = vmatpush1.msra.mxu0 %v647
  %685 = vmatprep.subr.mxu0 %v659
  %686 = vmatpush1.msra.mxu0 %v656
  %687 = vmatprep.subr.mxu0 0.0
  %688 = vmatpush1.msra.mxu0 0.0
  %689 = vmatprep.subr.mxu0 0.0
  %690 = vmatpush1.msra.mxu0 0.0
  %691 = vmatprep.subr.mxu0 0.0
  %692 = vmatpush1.msra.mxu0 0.0
  %693 = vmatprep.subr.mxu0 0.0
  %694 = vmatpush1.msra.mxu0 0.0
  %695 = vmatprep.subr.mxu0 0.0
  %696 = vmatpush1.msra.mxu0 0.0
  %697 = vmatprep.subr.mxu0 0.0
  %698 = vmatpush1.msra.mxu0 0.0
  %699 = vmatprep.subr.mxu0 0.0
  %700 = vmatpush1.msra.mxu0 0.0
  %701 = vmatprep.subr.mxu0 0.0
  %702 = vmatpush1.msra.mxu0 0.0
  %703 = vmatprep.subr.mxu0 0.0
  %704 = vmatpush1.msra.mxu0 0.0
  %705 = vmatprep.subr.mxu0 0.0
  %706 = vmatpush1.msra.mxu0 0.0
  %707 = vmatprep.subr.mxu0 0.0
  %708 = vmatpush1.msra.mxu0 0.0
  %709 = vmatprep.subr.mxu0 0.0
  %710 = vmatpush1.msra.mxu0 0.0
  %711 = vmatprep.subr.mxu0 0.0
  %712 = vmatpush1.msra.mxu0 0.0
  %713 = vmatprep.subr.mxu0 0.0
  %714 = vmatpush1.msra.mxu0 0.0
  %715 = vmatprep.subr.mxu0 0.0
  %716 = vmatpush1.msra.mxu0 0.0
  %717 = vmatprep.subr.mxu0 0.0
  %718 = vmatpush1.msra.mxu0 0.0
  %719 = vmatprep.subr.mxu0 0.0
  %720 = vmatpush1.msra.mxu0 0.0
  %721 = vmatprep.subr.mxu0 0.0
  %722 = vmatpush1.msra.mxu0 0.0
  %723 = vmatprep.subr.mxu0 0.0
  %724 = vmatpush1.msra.mxu0 0.0
  %725 = vmatprep.subr.mxu0 0.0
  %726 = vmatpush1.msra.mxu0 0.0
  %727 = vmatprep.subr.mxu0 0.0
  %728 = vmatpush1.msra.mxu0 0.0
  %729 = vmatprep.subr.mxu0 0.0
  %730 = vmatpush1.msra.mxu0 0.0
  %731 = vmatprep.mubr.f32.mxu0 0.0
  %732 = vmatmul.mubr.f32.gmra.mrb[0].mxu0 %v66
  %v733 = vpop.f32.mrb[0].mxu0
  %v734 = vadd.f32 0.0, %v733
  %v735 = vpop.f32.mrb[0].mxu0
  %v736 = vadd.f32 0.0, %v735
  %737 = vdwg.mxu0
  %738 = vmatprep.subr.mxu0 %v618
  %739 = vmatpush1.msra.mxu0 %v617
  %740 = vmatprep.subr.mxu0 %v622
  %741 = vmatpush1.msra.mxu0 %v621
  %742 = vmatprep.subr.mxu0 %v626
  %743 = vmatpush1.msra.mxu0 %v625
  %744 = vmatprep.subr.mxu0 %v630
  %745 = vmatpush1.msra.mxu0 %v629
  %746 = vmatprep.subr.mxu0 %v634
  %747 = vmatpush1.msra.mxu0 %v633
  %748 = vmatprep.subr.mxu0 %v638
  %749 = vmatpush1.msra.mxu0 %v637
  %750 = vmatprep.subr.mxu0 %v642
  %751 = vmatpush1.msra.mxu0 %v641
  %752 = vmatprep.subr.mxu0 %v646
  %753 = vmatpush1.msra.mxu0 %v645
  %754 = vmatprep.subr.mxu0 %v650
  %755 = vmatpush1.msra.mxu0 %v649
  %756 = vmatprep.subr.mxu0 %v665
  %757 = vmatpush1.msra.mxu0 %v662
  %758 = vmatprep.subr.mxu0 0.0
  %759 = vmatpush1.msra.mxu0 0.0
  %760 = vmatprep.subr.mxu0 0.0
  %761 = vmatpush1.msra.mxu0 0.0
  %762 = vmatprep.subr.mxu0 0.0
  %763 = vmatpush1.msra.mxu0 0.0
  %764 = vmatprep.subr.mxu0 0.0
  %765 = vmatpush1.msra.mxu0 0.0
  %766 = vmatprep.subr.mxu0 0.0
  %767 = vmatpush1.msra.mxu0 0.0
  %768 = vmatprep.subr.mxu0 0.0
  %769 = vmatpush1.msra.mxu0 0.0
  %770 = vmatprep.subr.mxu0 0.0
  %771 = vmatpush1.msra.mxu0 0.0
  %772 = vmatprep.subr.mxu0 0.0
  %773 = vmatpush1.msra.mxu0 0.0
  %774 = vmatprep.subr.mxu0 0.0
  %775 = vmatpush1.msra.mxu0 0.0
  %776 = vmatprep.subr.mxu0 0.0
  %777 = vmatpush1.msra.mxu0 0.0
  %778 = vmatprep.subr.mxu0 0.0
  %779 = vmatpush1.msra.mxu0 0.0
  %780 = vmatprep.subr.mxu0 0.0
  %781 = vmatpush1.msra.mxu0 0.0
  %782 = vmatprep.subr.mxu0 0.0
  %783 = vmatpush1.msra.mxu0 0.0
  %784 = vmatprep.subr.mxu0 0.0
  %785 = vmatpush1.msra.mxu0 0.0
  %786 = vmatprep.subr.mxu0 0.0
  %787 = vmatpush1.msra.mxu0 0.0
  %788 = vmatprep.subr.mxu0 0.0
  %789 = vmatpush1.msra.mxu0 0.0
  %790 = vmatprep.subr.mxu0 0.0
  %791 = vmatpush1.msra.mxu0 0.0
  %792 = vmatprep.subr.mxu0 0.0
  %793 = vmatpush1.msra.mxu0 0.0
  %794 = vmatprep.subr.mxu0 0.0
  %795 = vmatpush1.msra.mxu0 0.0
  %796 = vmatprep.subr.mxu0 0.0
  %797 = vmatpush1.msra.mxu0 0.0
  %798 = vmatprep.subr.mxu0 0.0
  %799 = vmatpush1.msra.mxu0 0.0
  %800 = vmatprep.subr.mxu0 0.0
  %801 = vmatpush1.msra.mxu0 0.0
  %802 = vmatprep.mubr.f32.mxu0 0.0
  %803 = vmatmul.mubr.f32.gmra.mrb[0].mxu0 %v66
  %v804 = vpop.f32.mrb[0].mxu0
  %v805 = vadd.f32 0.0, %v804
  %v806 = vpop.f32.mrb[0].mxu0
  %v807 = vadd.f32 0.0, %v806
  %808 = vdwg.mxu0
  %v809 = vmax.f32 %v540, %v734
  %v810 = vmax.f32 %v542, %v736
  %v811 = vmax.f32 %v611, %v805
  %v812 = vmax.f32 %v613, %v807
  %v813 = vmax.f32 %v417, %v809
  %v814 = vmax.f32 %v418, %v810
  %v815 = vmax.f32 %v419, %v811
  %v816 = vmax.f32 %v420, %v812
  %v817 = vld [vmem:[%s1] sm:$0x3f]
  %819 = vset.pattern.permute.xlu0 0
  %820 = vperm.xlu0 %819, %v817
  %v821 = vpop.permute.xlu0 %820
  %v823 = vadd.f32 %v813, %v821
  %v824 = vadd.f32 %v814, %v821
  %v825 = vadd.f32 %v815, %v821
  %v826 = vadd.f32 %v816, %v821
  %v827 = vmax.f32 %v823, 0.0
  %v828 = vmax.f32 %v824, 0.0
  %v829 = vmax.f32 %v825, 0.0
  %v830 = vmax.f32 %v826, 0.0
  %831 = vst [vmem:[%s6] sm:$0x3f] %v827
  %832 = vst [vmem:[%s6 + $0x8] sm:$0x3f] %v828
  %833 = vst [vmem:[%s6 + $0x10] sm:$0x3f] %v829
  %vm834 = vcmask 62464
  %835 = vst.msk [vmem:[%s6 + $0x18] sm:$0x3f] %vm834, %v830
  // Predicated region
  $region26: #{cnn_forward.3} parent=0 // pred_check
    _
  $region27: #{cnn_forward.3} parent=0 // pred_check_branch
    %837 = sbr.rel (0) target = $region29
  $region28: #{cnn_forward.3} parent=0 // pred_region
    _
  $region29: #{cnn_forward.3} parent=0 // pred_fallthru
    _
  // Predicated region
  $region30: #{cnn_forward.3} parent=0 // pred_check
    _
  $region31: #{cnn_forward.3} parent=0 // pred_check_branch
    %839 = sbr.rel (0) target = $region33
  $region32: #{cnn_forward.3} parent=0 // pred_region
    _
  $region33: #{cnn_forward.3} parent=0 // pred_fallthru
    _

// kernel: cnn_forward.4
$region0: #{cnn_forward.4}
  #allocation0 [shape = 'u32[]', space=smem, size = 0x4, offset = 0x4, fixed_abs, tag = 'smem constant byte address 0x4 - core index']
  #allocation1 [shape = 'u32[144,128]{1,0:T(1,128)}', space=vmem, size = 0x12000, scoped, tag = 'internal scratch']
  %s0 = inlined_call_operand.vmem [shape: f32[16,150], index: 0, kind: input, shape index: {}]
  %s1 = inlined_call_operand.vmem [shape: f32[16,1], index: 1, kind: input, shape index: {}]
  %s2 = inlined_call_operand.vmem [shape: f32[150,50], index: 2, kind: input, shape index: {}]
  %s3 = inlined_call_operand.vmem [shape: f32[150,50], index: 3, kind: input, shape index: {}]
  %s4 = inlined_call_operand.vmem [shape: f32[150,50], index: 4, kind: input, shape index: {}]
  %s5 = inlined_call_operand.vmem [shape: f32[150,50], index: 5, kind: input, shape index: {}]
  %s6 = inlined_call_operand.vmem [shape: f32[16,50], index: 6, kind: output, shape index: {}]
  %s7 = sld [smem:[#allocation0]]
  $region34: #{cnn_forward.4} parent=0
    _
  %s9 = ssub.s32 1, %s7
  %s10 = scalar_select 0, %s9, %s7
  // Predicated region
  $region2: #{cnn_forward.4} parent=0 // pred_check
    _
  $region3: #{cnn_forward.4} parent=0 // pred_check_branch
    %12 = sbr.rel (0) target = $region5
  $region4: #{cnn_forward.4} parent=0 // pred_region
    _
  $region5: #{cnn_forward.4} parent=0 // pred_fallthru
    _
  // Predicated region
  $region6: #{cnn_forward.4} parent=0 // pred_check
    _
  $region7: #{cnn_forward.4} parent=0 // pred_check_branch
    %14 = sbr.rel (0) target = $region9
  $region8: #{cnn_forward.4} parent=0 // pred_region
    _
  $region9: #{cnn_forward.4} parent=0 // pred_fallthru
    _
  // Predicated region
  $region10: #{cnn_forward.4} parent=0 // pred_check
    _
  $region11: #{cnn_forward.4} parent=0 // pred_check_branch
    %16 = sbr.rel (0) target = $region13
  $region12: #{cnn_forward.4} parent=0 // pred_region
    _
  $region13: #{cnn_forward.4} parent=0 // pred_fallthru
    _
  // Predicated region
  $region14: #{cnn_forward.4} parent=0 // pred_check
    _
  $region15: #{cnn_forward.4} parent=0 // pred_check_branch
    %18 = sbr.rel (0) target = $region17
  $region16: #{cnn_forward.4} parent=0 // pred_region
    _
  $region17: #{cnn_forward.4} parent=0 // pred_fallthru
    _
  // Predicated region
  $region18: #{cnn_forward.4} parent=0 // pred_check
    _
  $region19: #{cnn_forward.4} parent=0 // pred_check_branch
    %20 = sbr.rel (0) target = $region21
  $region20: #{cnn_forward.4} parent=0 // pred_region
    _
  $region21: #{cnn_forward.4} parent=0 // pred_fallthru
    _
  // Predicated region
  $region22: #{cnn_forward.4} parent=0 // pred_check
    _
  $region23: #{cnn_forward.4} parent=0 // pred_check_branch
    %22 = sbr.rel (0) target = $region25
  $region24: #{cnn_forward.4} parent=0 // pred_region
    _
  $region25: #{cnn_forward.4} parent=0 // pred_fallthru
    _
  %v23 = vld [vmem:[%s0] sm:$0xff]
  %v24 = vld [vmem:[%s0 + $0x8] sm:$0xff]
  %v25 = vld [vmem:[%s0 + $0x10] sm:$0xff]
  %v26 = vld [vmem:[%s0 + $0x18] sm:$0xff]
  %v27 = vld [vmem:[%s2] sm:$0xff]
  %v28 = vld [vmem:[%s2 + $0x8] sm:$0xff]
  %v29 = vld [vmem:[%s2 + $0x10] sm:$0xff]
  %v30 = vld [vmem:[%s2 + $0x18] sm:$0xff]
  %v31 = vld [vmem:[%s2 + $0x20] sm:$0xff]
  %v32 = vld [vmem:[%s2 + $0x28] sm:$0xff]
  %v33 = vld [vmem:[%s2 + $0x30] sm:$0xff]
  %v34 = vld [vmem:[%s2 + $0x38] sm:$0xff]
  %v35 = vld [vmem:[%s2 + $0x40] sm:$0xff]
  %v36 = vld [vmem:[%s2 + $0x48] sm:$0xff]
  %v37 = vld [vmem:[%s2 + $0x50] sm:$0xff]
  %v38 = vld [vmem:[%s2 + $0x58] sm:$0xff]
  %v39 = vld [vmem:[%s2 + $0x60] sm:$0xff]
  %v40 = vld [vmem:[%s2 + $0x68] sm:$0xff]
  %v41 = vld [vmem:[%s2 + $0x70] sm:$0xff]
  %v42 = vld [vmem:[%s2 + $0x78] sm:$0xff]
  %v43 = vld [vmem:[%s2 + $0x80] sm:$0xff]
  %v44 = vld [vmem:[%s2 + $0x88] sm:$0xff]
  %v45 = vld [vmem:[%s2 + $0x90] sm:$0x3f]
  %vm46 = vcmask 179200
  %v48 = vsel %vm46, %v24, 0
  %v51 = vsel %vm46, %v26, 0
  %vm53 = vcmask 1045504
  %v55 = vsel %vm53, %v45, 0
  %57 = vmatprep.subr.mxu0 0.0
  %58 = vmatpush1.msra.mxu0 %v27
  %59 = vmatprep.subr.mxu0 0.0
  %60 = vmatpush1.msra.mxu0 %v28
  %61 = vmatprep.subr.mxu0 0.0
  %62 = vmatpush1.msra.mxu0 %v29
  %63 = vmatprep.subr.mxu0 0.0
  %64 = vmatpush1.msra.mxu0 %v30
  %65 = vmatprep.subr.mxu0 0.0
  %66 = vmatpush1.msra.mxu0 %v31
  %67 = vmatprep.subr.mxu0 0.0
  %68 = vmatpush1.msra.mxu0 %v32
  %69 = vmatprep.subr.mxu0 0.0
  %70 = vmatpush1.msra.mxu0 %v33
  %71 = vmatprep.subr.mxu0 0.0
  %72 = vmatpush1.msra.mxu0 %v34
  %73 = vmatprep.subr.mxu0 0.0
  %74 = vmatpush1.msra.mxu0 %v35
  %75 = vmatprep.subr.mxu0 0.0
  %76 = vmatpush1.msra.mxu0 %v36
  %77 = vmatprep.subr.mxu0 0.0
  %78 = vmatpush1.msra.mxu0 %v37
  %79 = vmatprep.subr.mxu0 0.0
  %80 = vmatpush1.msra.mxu0 %v38
  %81 = vmatprep.subr.mxu0 0.0
  %82 = vmatpush1.msra.mxu0 %v39
  %83 = vmatprep.subr.mxu0 0.0
  %84 = vmatpush1.msra.mxu0 %v40
  %85 = vmatprep.subr.mxu0 0.0
  %86 = vmatpush1.msra.mxu0 %v41
  %87 = vmatprep.subr.mxu0 0.0
  %88 = vmatpush1.msra.mxu0 %v42
  %89 = vmatprep.subr.mxu0 0.0
  %90 = vmatpush1.msra.mxu0 %v43
  %91 = vmatprep.subr.mxu0 0.0
  %92 = vmatpush1.msra.mxu0 %v44
  %93 = vmatprep.subr.mxu0 0.0
  %94 = vmatpush1.msra.mxu0 %v55
  %95 = vmatprep.subr.mxu0 0.0
  %96 = vmatpush1.msra.mxu0 0.0
  %97 = vmatprep.subr.mxu0 0.0
  %98 = vmatpush1.msra.mxu0 0.0
  %99 = vmatprep.subr.mxu0 0.0
  %100 = vmatpush1.msra.mxu0 0.0
  %101 = vmatprep.subr.mxu0 0.0
  %102 = vmatpush1.msra.mxu0 0.0
  %103 = vmatprep.subr.mxu0 0.0
  %104 = vmatpush1.msra.mxu0 0.0
  %105 = vmatprep.subr.mxu0 0.0
  %106 = vmatpush1.msra.mxu0 0.0
  %107 = vmatprep.subr.mxu0 0.0
  %108 = vmatpush1.msra.mxu0 0.0
  %109 = vmatprep.subr.mxu0 0.0
  %110 = vmatpush1.msra.mxu0 0.0
  %111 = vmatprep.subr.mxu0 0.0
  %112 = vmatpush1.msra.mxu0 0.0
  %113 = vmatprep.subr.mxu0 0.0
  %114 = vmatpush1.msra.mxu0 0.0
  %115 = vmatprep.subr.mxu0 0.0
  %116 = vmatpush1.msra.mxu0 0.0
  %117 = vmatprep.subr.mxu0 0.0
  %118 = vmatpush1.msra.mxu0 0.0
  %119 = vmatprep.subr.mxu0 0.0
  %120 = vmatpush1.msra.mxu0 0.0
  %121 = vmatprep.mubr.f32.mxu0 %v48
  %122 = vmatmul.mubr.f32.gmra.mrb[0].mxu0 %v23
  %v123 = vpop.f32.mrb[0].mxu0
  %v124 = vadd.f32 0.0, %v123
  %v125 = vpop.f32.mrb[0].mxu0
  %126 = vmatprep.mubr.f32.mxu0 %v51
  %127 = vmatmul.mubr.f32.gmra.mrb[0].mxu0 %v25
  %v128 = vpop.f32.mrb[0].mxu0
  %v129 = vadd.f32 0.0, %v128
  %v130 = vpop.f32.mrb[0].mxu0
  %131 = vdwg.mxu0
  %v132 = vld [vmem:[%s3] sm:$0xff]
  %v133 = vld [vmem:[%s3 + $0x8] sm:$0xff]
  %v134 = vld [vmem:[%s3 + $0x10] sm:$0xff]
  %v135 = vld [vmem:[%s3 + $0x18] sm:$0xff]
  %v136 = vld [vmem:[%s3 + $0x20] sm:$0xff]
  %v137 = vld [vmem:[%s3 + $0x28] sm:$0xff]
  %v138 = vld [vmem:[%s3 + $0x30] sm:$0xff]
  %v139 = vld [vmem:[%s3 + $0x38] sm:$0xff]
  %v140 = vld [vmem:[%s3 + $0x40] sm:$0xff]
  %v141 = vld [vmem:[%s3 + $0x48] sm:$0xff]
  %v142 = vld [vmem:[%s3 + $0x50] sm:$0xff]
  %v143 = vld [vmem:[%s3 + $0x58] sm:$0xff]
  %v144 = vld [vmem:[%s3 + $0x60] sm:$0xff]
  %v145 = vld [vmem:[%s3 + $0x68] sm:$0xff]
  %v146 = vld [vmem:[%s3 + $0x70] sm:$0xff]
  %v147 = vld [vmem:[%s3 + $0x78] sm:$0xff]
  %v148 = vld [vmem:[%s3 + $0x80] sm:$0xff]
  %v149 = vld [vmem:[%s3 + $0x88] sm:$0xff]
  %v150 = vld [vmem:[%s3 + $0x90] sm:$0x3f]
  %v152 = vsel %vm53, %v150, 0
  %154 = vmatprep.subr.mxu0 0.0
  %155 = vmatpush1.msra.mxu0 %v132
  %156 = vmatprep.subr.mxu0 0.0
  %157 = vmatpush1.msra.mxu0 %v133
  %158 = vmatprep.subr.mxu0 0.0
  %159 = vmatpush1.msra.mxu0 %v134
  %160 = vmatprep.subr.mxu0 0.0
  %161 = vmatpush1.msra.mxu0 %v135
  %162 = vmatprep.subr.mxu0 0.0
  %163 = vmatpush1.msra.mxu0 %v136
  %164 = vmatprep.subr.mxu0 0.0
  %165 = vmatpush1.msra.mxu0 %v137
  %166 = vmatprep.subr.mxu0 0.0
  %167 = vmatpush1.msra.mxu0 %v138
  %168 = vmatprep.subr.mxu0 0.0
  %169 = vmatpush1.msra.mxu0 %v139
  %170 = vmatprep.subr.mxu0 0.0
  %171 = vmatpush1.msra.mxu0 %v140
  %172 = vmatprep.subr.mxu0 0.0
  %173 = vmatpush1.msra.mxu0 %v141
  %174 = vmatprep.subr.mxu0 0.0
  %175 = vmatpush1.msra.mxu0 %v142
  %176 = vmatprep.subr.mxu0 0.0
  %177 = vmatpush1.msra.mxu0 %v143
  %178 = vmatprep.subr.mxu0 0.0
  %179 = vmatpush1.msra.mxu0 %v144
  %180 = vmatprep.subr.mxu0 0.0
  %181 = vmatpush1.msra.mxu0 %v145
  %182 = vmatprep.subr.mxu0 0.0
  %183 = vmatpush1.msra.mxu0 %v146
  %184 = vmatprep.subr.mxu0 0.0
  %185 = vmatpush1.msra.mxu0 %v147
  %186 = vmatprep.subr.mxu0 0.0
  %187 = vmatpush1.msra.mxu0 %v148
  %188 = vmatprep.subr.mxu0 0.0
  %189 = vmatpush1.msra.mxu0 %v149
  %190 = vmatprep.subr.mxu0 0.0
  %191 = vmatpush1.msra.mxu0 %v152
  %192 = vmatprep.subr.mxu0 0.0
  %193 = vmatpush1.msra.mxu0 0.0
  %194 = vmatprep.subr.mxu0 0.0
  %195 = vmatpush1.msra.mxu0 0.0
  %196 = vmatprep.subr.mxu0 0.0
  %197 = vmatpush1.msra.mxu0 0.0
  %198 = vmatprep.subr.mxu0 0.0
  %199 = vmatpush1.msra.mxu0 0.0
  %200 = vmatprep.subr.mxu0 0.0
  %201 = vmatpush1.msra.mxu0 0.0
  %202 = vmatprep.subr.mxu0 0.0
  %203 = vmatpush1.msra.mxu0 0.0
  %204 = vmatprep.subr.mxu0 0.0
  %205 = vmatpush1.msra.mxu0 0.0
  %206 = vmatprep.subr.mxu0 0.0
  %207 = vmatpush1.msra.mxu0 0.0
  %208 = vmatprep.subr.mxu0 0.0
  %209 = vmatpush1.msra.mxu0 0.0
  %210 = vmatprep.subr.mxu0 0.0
  %211 = vmatpush1.msra.mxu0 0.0
  %212 = vmatprep.subr.mxu0 0.0
  %213 = vmatpush1.msra.mxu0 0.0
  %214 = vmatprep.subr.mxu0 0.0
  %215 = vmatpush1.msra.mxu0 0.0
  %216 = vmatprep.subr.mxu0 0.0
  %217 = vmatpush1.msra.mxu0 0.0
  %218 = vmatprep.mubr.f32.mxu0 %v48
  %219 = vmatmul.mubr.f32.gmra.mrb[0].mxu0 %v23
  %v220 = vpop.f32.mrb[0].mxu0
  %v221 = vadd.f32 0.0, %v220
  %v222 = vpop.f32.mrb[0].mxu0
  %223 = vmatprep.mubr.f32.mxu0 %v51
  %224 = vmatmul.mubr.f32.gmra.mrb[0].mxu0 %v25
  %v225 = vpop.f32.mrb[0].mxu0
  %v226 = vadd.f32 0.0, %v225
  %v227 = vpop.f32.mrb[0].mxu0
  %228 = vdwg.mxu0
  %v229 = vmax.f32 %v124, %v221
  %v230 = vmax.f32 %v129, %v226
  %v231 = vld [vmem:[%s4] sm:$0xff]
  %v232 = vld [vmem:[%s4 + $0x8] sm:$0xff]
  %v233 = vld [vmem:[%s4 + $0x10] sm:$0xff]
  %v234 = vld [vmem:[%s4 + $0x18] sm:$0xff]
  %v235 = vld [vmem:[%s4 + $0x20] sm:$0xff]
  %v236 = vld [vmem:[%s4 + $0x28] sm:$0xff]
  %v237 = vld [vmem:[%s4 + $0x30] sm:$0xff]
  %v238 = vld [vmem:[%s4 + $0x38] sm:$0xff]
  %v239 = vld [vmem:[%s4 + $0x40] sm:$0xff]
  %v240 = vld [vmem:[%s4 + $0x48] sm:$0xff]
  %v241 = vld [vmem:[%s4 + $0x50] sm:$0xff]
  %v242 = vld [vmem:[%s4 + $0x58] sm:$0xff]
  %v243 = vld [vmem:[%s4 + $0x60] sm:$0xff]
  %v244 = vld [vmem:[%s4 + $0x68] sm:$0xff]
  %v245 = vld [vmem:[%s4 + $0x70] sm:$0xff]
  %v246 = vld [vmem:[%s4 + $0x78] sm:$0xff]
  %v247 = vld [vmem:[%s4 + $0x80] sm:$0xff]
  %v248 = vld [vmem:[%s4 + $0x88] sm:$0xff]
  %v249 = vld [vmem:[%s4 + $0x90] sm:$0x3f]
  %v251 = vsel %vm53, %v249, 0
  %253 = vmatprep.subr.mxu0 0.0
  %254 = vmatpush1.msra.mxu0 %v231
  %255 = vmatprep.subr.mxu0 0.0
  %256 = vmatpush1.msra.mxu0 %v232
  %257 = vmatprep.subr.mxu0 0.0
  %258 = vmatpush1.msra.mxu0 %v233
  %259 = vmatprep.subr.mxu0 0.0
  %260 = vmatpush1.msra.mxu0 %v234
  %261 = vmatprep.subr.mxu0 0.0
  %262 = vmatpush1.msra.mxu0 %v235
  %263 = vmatprep.subr.mxu0 0.0
  %264 = vmatpush1.msra.mxu0 %v236
  %265 = vmatprep.subr.mxu0 0.0
  %266 = vmatpush1.msra.mxu0 %v237
  %267 = vmatprep.subr.mxu0 0.0
  %268 = vmatpush1.msra.mxu0 %v238
  %269 = vmatprep.subr.mxu0 0.0
  %270 = vmatpush1.msra.mxu0 %v239
  %271 = vmatprep.subr.mxu0 0.0
  %272 = vmatpush1.msra.mxu0 %v240
  %273 = vmatprep.subr.mxu0 0.0
  %274 = vmatpush1.msra.mxu0 %v241
  %275 = vmatprep.subr.mxu0 0.0
  %276 = vmatpush1.msra.mxu0 %v242
  %277 = vmatprep.subr.mxu0 0.0
  %278 = vmatpush1.msra.mxu0 %v243
  %279 = vmatprep.subr.mxu0 0.0
  %280 = vmatpush1.msra.mxu0 %v244
  %281 = vmatprep.subr.mxu0 0.0
  %282 = vmatpush1.msra.mxu0 %v245
  %283 = vmatprep.subr.mxu0 0.0
  %284 = vmatpush1.msra.mxu0 %v246
  %285 = vmatprep.subr.mxu0 0.0
  %286 = vmatpush1.msra.mxu0 %v247
  %287 = vmatprep.subr.mxu0 0.0
  %288 = vmatpush1.msra.mxu0 %v248
  %289 = vmatprep.subr.mxu0 0.0
  %290 = vmatpush1.msra.mxu0 %v251
  %291 = vmatprep.subr.mxu0 0.0
  %292 = vmatpush1.msra.mxu0 0.0
  %293 = vmatprep.subr.mxu0 0.0
  %294 = vmatpush1.msra.mxu0 0.0
  %295 = vmatprep.subr.mxu0 0.0
  %296 = vmatpush1.msra.mxu0 0.0
  %297 = vmatprep.subr.mxu0 0.0
  %298 = vmatpush1.msra.mxu0 0.0
  %299 = vmatprep.subr.mxu0 0.0
  %300 = vmatpush1.msra.mxu0 0.0
  %301 = vmatprep.subr.mxu0 0.0
  %302 = vmatpush1.msra.mxu0 0.0
  %303 = vmatprep.subr.mxu0 0.0
  %304 = vmatpush1.msra.mxu0 0.0
  %305 = vmatprep.subr.mxu0 0.0
  %306 = vmatpush1.msra.mxu0 0.0
  %307 = vmatprep.subr.mxu0 0.0
  %308 = vmatpush1.msra.mxu0 0.0
  %309 = vmatprep.subr.mxu0 0.0
  %310 = vmatpush1.msra.mxu0 0.0
  %311 = vmatprep.subr.mxu0 0.0
  %312 = vmatpush1.msra.mxu0 0.0
  %313 = vmatprep.subr.mxu0 0.0
  %314 = vmatpush1.msra.mxu0 0.0
  %315 = vmatprep.subr.mxu0 0.0
  %316 = vmatpush1.msra.mxu0 0.0
  %317 = vmatprep.mubr.f32.mxu0 %v48
  %318 = vmatmul.mubr.f32.gmra.mrb[0].mxu0 %v23
  %v319 = vpop.f32.mrb[0].mxu0
  %v320 = vadd.f32 0.0, %v319
  %v321 = vpop.f32.mrb[0].mxu0
  %322 = vmatprep.mubr.f32.mxu0 %v51
  %323 = vmatmul.mubr.f32.gmra.mrb[0].mxu0 %v25
  %v324 = vpop.f32.mrb[0].mxu0
  %v325 = vadd.f32 0.0, %v324
  %v326 = vpop.f32.mrb[0].mxu0
  %327 = vdwg.mxu0
  %v328 = vld [vmem:[%s5] sm:$0xff]
  %v329 = vld [vmem:[%s5 + $0x8] sm:$0xff]
  %v330 = vld [vmem:[%s5 + $0x10] sm:$0xff]
  %v331 = vld [vmem:[%s5 + $0x18] sm:$0xff]
  %v332 = vld [vmem:[%s5 + $0x20] sm:$0xff]
  %v333 = vld [vmem:[%s5 + $0x28] sm:$0xff]
  %v334 = vld [vmem:[%s5 + $0x30] sm:$0xff]
  %v335 = vld [vmem:[%s5 + $0x38] sm:$0xff]
  %v336 = vld [vmem:[%s5 + $0x40] sm:$0xff]
  %v337 = vld [vmem:[%s5 + $0x48] sm:$0xff]
  %v338 = vld [vmem:[%s5 + $0x50] sm:$0xff]
  %v339 = vld [vmem:[%s5 + $0x58] sm:$0xff]
  %v340 = vld [vmem:[%s5 + $0x60] sm:$0xff]
  %v341 = vld [vmem:[%s5 + $0x68] sm:$0xff]
  %v342 = vld [vmem:[%s5 + $0x70] sm:$0xff]
  %v343 = vld [vmem:[%s5 + $0x78] sm:$0xff]
  %v344 = vld [vmem:[%s5 + $0x80] sm:$0xff]
  %v345 = vld [vmem:[%s5 + $0x88] sm:$0xff]
  %v346 = vld [vmem:[%s5 + $0x90] sm:$0x3f]
  %v348 = vsel %vm53, %v346, 0
  %350 = vmatprep.subr.mxu0 0.0
  %351 = vmatpush1.msra.mxu0 %v328
  %352 = vmatprep.subr.mxu0 0.0
  %353 = vmatpush1.msra.mxu0 %v329
  %354 = vmatprep.subr.mxu0 0.0
  %355 = vmatpush1.msra.mxu0 %v330
  %356 = vmatprep.subr.mxu0 0.0
  %357 = vmatpush1.msra.mxu0 %v331
  %358 = vmatprep.subr.mxu0 0.0
  %359 = vmatpush1.msra.mxu0 %v332
  %360 = vmatprep.subr.mxu0 0.0
  %361 = vmatpush1.msra.mxu0 %v333
  %362 = vmatprep.subr.mxu0 0.0
  %363 = vmatpush1.msra.mxu0 %v334
  %364 = vmatprep.subr.mxu0 0.0
  %365 = vmatpush1.msra.mxu0 %v335
  %366 = vmatprep.subr.mxu0 0.0
  %367 = vmatpush1.msra.mxu0 %v336
  %368 = vmatprep.subr.mxu0 0.0
  %369 = vmatpush1.msra.mxu0 %v337
  %370 = vmatprep.subr.mxu0 0.0
  %371 = vmatpush1.msra.mxu0 %v338
  %372 = vmatprep.subr.mxu0 0.0
  %373 = vmatpush1.msra.mxu0 %v339
  %374 = vmatprep.subr.mxu0 0.0
  %375 = vmatpush1.msra.mxu0 %v340
  %376 = vmatprep.subr.mxu0 0.0
  %377 = vmatpush1.msra.mxu0 %v341
  %378 = vmatprep.subr.mxu0 0.0
  %379 = vmatpush1.msra.mxu0 %v342
  %380 = vmatprep.subr.mxu0 0.0
  %381 = vmatpush1.msra.mxu0 %v343
  %382 = vmatprep.subr.mxu0 0.0
  %383 = vmatpush1.msra.mxu0 %v344
  %384 = vmatprep.subr.mxu0 0.0
  %385 = vmatpush1.msra.mxu0 %v345
  %386 = vmatprep.subr.mxu0 0.0
  %387 = vmatpush1.msra.mxu0 %v348
  %388 = vmatprep.subr.mxu0 0.0
  %389 = vmatpush1.msra.mxu0 0.0
  %390 = vmatprep.subr.mxu0 0.0
  %391 = vmatpush1.msra.mxu0 0.0
  %392 = vmatprep.subr.mxu0 0.0
  %393 = vmatpush1.msra.mxu0 0.0
  %394 = vmatprep.subr.mxu0 0.0
  %395 = vmatpush1.msra.mxu0 0.0
  %396 = vmatprep.subr.mxu0 0.0
  %397 = vmatpush1.msra.mxu0 0.0
  %398 = vmatprep.subr.mxu0 0.0
  %399 = vmatpush1.msra.mxu0 0.0
  %400 = vmatprep.subr.mxu0 0.0
  %401 = vmatpush1.msra.mxu0 0.0
  %402 = vmatprep.subr.mxu0 0.0
  %403 = vmatpush1.msra.mxu0 0.0
  %404 = vmatprep.subr.mxu0 0.0
  %405 = vmatpush1.msra.mxu0 0.0
  %406 = vmatprep.subr.mxu0 0.0
  %407 = vmatpush1.msra.mxu0 0.0
  %408 = vmatprep.subr.mxu0 0.0
  %409 = vmatpush1.msra.mxu0 0.0
  %410 = vmatprep.subr.mxu0 0.0
  %411 = vmatpush1.msra.mxu0 0.0
  %412 = vmatprep.subr.mxu0 0.0
  %413 = vmatpush1.msra.mxu0 0.0
  %414 = vmatprep.mubr.f32.mxu0 %v48
  %415 = vmatmul.mubr.f32.gmra.mrb[0].mxu0 %v23
  %v416 = vpop.f32.mrb[0].mxu0
  %v417 = vadd.f32 0.0, %v416
  %v418 = vpop.f32.mrb[0].mxu0
  %419 = vmatprep.mubr.f32.mxu0 %v51
  %420 = vmatmul.mubr.f32.gmra.mrb[0].mxu0 %v25
  %v421 = vpop.f32.mrb[0].mxu0
  %v422 = vadd.f32 0.0, %v421
  %v423 = vpop.f32.mrb[0].mxu0
  %424 = vdwg.mxu0
  %v425 = vmax.f32 %v320, %v417
  %v426 = vmax.f32 %v325, %v422
  %v427 = vmax.f32 %v229, %v425
  %v428 = vmax.f32 %v230, %v426
  %v429 = vld [vmem:[%s1] sm:$0xff]
  %v430 = vld [vmem:[%s1 + $0x8] sm:$0xff]
  %432 = vset.pattern.permute.xlu0 0
  %433 = vperm.xlu0 %432, %v429
  %v434 = vpop.permute.xlu0 %433
  %437 = vset.pattern.permute.xlu0 0
  %438 = vperm.xlu0 %437, %v430
  %v439 = vpop.permute.xlu0 %438
  %v441 = vadd.f32 %v427, %v434
  %v442 = vadd.f32 %v428, %v439
  %v443 = vmax.f32 %v441, 0.0
  %v444 = vmax.f32 %v442, 0.0
  %vm445 = vcmask 408576
  %446 = vst.msk [vmem:[%s6] sm:$0xff] %vm445, %v443
  %447 = vst.msk [vmem:[%s6 + $0x8] sm:$0xff] %vm445, %v444
  // Predicated region
  $region26: #{cnn_forward.4} parent=0 // pred_check
    _
  $region27: #{cnn_forward.4} parent=0 // pred_check_branch
    %449 = sbr.rel (0) target = $region29
  $region28: #{cnn_forward.4} parent=0 // pred_region
    _
  $region29: #{cnn_forward.4} parent=0 // pred_fallthru
    _
  // Predicated region
  $region30: #{cnn_forward.4} parent=0 // pred_check
    _
  $region31: #{cnn_forward.4} parent=0 // pred_check_branch
    %451 = sbr.rel (0) target = $region33
  $region32: #{cnn_forward.4} parent=0 // pred_region
    _
  $region33: #{cnn_forward.4} parent=0 // pred_fallthru
    _

// kernel: cnn_forward.5
$region0: #{cnn_forward.5}
  #allocation0 [shape = 'u32[]', space=smem, size = 0x4, offset = 0x4, fixed_abs, tag = 'smem constant byte address 0x4 - core index']
  #allocation1 [shape = 'u32[144,128]{1,0:T(1,128)}', space=vmem, size = 0x12000, scoped, tag = 'internal scratch']
  %s0 = inlined_call_operand.vmem [shape: f32[2,400], index: 0, kind: input, shape index: {}]
  %s1 = inlined_call_operand.vmem [shape: f32[400,120], index: 1, kind: input, shape index: {}]
  %s2 = inlined_call_operand.vmem [shape: f32[1,120], index: 2, kind: input, shape index: {}]
  %s3 = inlined_call_operand.vmem [shape: f32[120,84], index: 3, kind: input, shape index: {}]
  %s4 = inlined_call_operand.vmem [shape: f32[1,84], index: 4, kind: input, shape index: {}]
  %s5 = inlined_call_operand.vmem [shape: f32[84,10], index: 5, kind: input, shape index: {}]
  %s6 = inlined_call_operand.vmem [shape: f32[1,10], index: 6, kind: input, shape index: {}]
  %s7 = inlined_call_operand.hbm [shape: f32[2,10], index: 7, kind: output, shape index: {}]
  %s8 = sld [smem:[#allocation0]]
  $region38: #{cnn_forward.5} parent=0
    _
  %s10 = ssub.s32 1, %s8
  %s11 = scalar_select 0, %s10, %s8
  $region1: #{cnn_forward.5} parent=0
    #allocation2 [shape = 'u8[1024]{0}', space=vmem, size = 0x400, scoped, tag = 'output window, operand 0, single buffered']
    #allocation3 [shape = 's32[1]{0}', space=sflag, size = 0x4, scoped, tag = 'scoped memory for cnn_forward.5']
    %12 = vsyncpa [#allocation3], 0
    // Predicated region
    $region2: #{cnn_forward.5} parent=1 // pred_check
      _
    $region3: #{cnn_forward.5} parent=1 // pred_check_branch
      %14 = sbr.rel (0) target = $region5
    $region4: #{cnn_forward.5} parent=1 // pred_region
      _
    $region5: #{cnn_forward.5} parent=1 // pred_fallthru
      _
    // Predicated region
    $region6: #{cnn_forward.5} parent=1 // pred_check
      _
    $region7: #{cnn_forward.5} parent=1 // pred_check_branch
      %16 = sbr.rel (0) target = $region9
    $region8: #{cnn_forward.5} parent=1 // pred_region
      _
    $region9: #{cnn_forward.5} parent=1 // pred_fallthru
      _
    // Predicated region
    $region10: #{cnn_forward.5} parent=1 // pred_check
      _
    $region11: #{cnn_forward.5} parent=1 // pred_check_branch
      %18 = sbr.rel (0) target = $region13
    $region12: #{cnn_forward.5} parent=1 // pred_region
      _
    $region13: #{cnn_forward.5} parent=1 // pred_fallthru
      _
    // Predicated region
    $region14: #{cnn_forward.5} parent=1 // pred_check
      _
    $region15: #{cnn_forward.5} parent=1 // pred_check_branch
      %20 = sbr.rel (0) target = $region17
    $region16: #{cnn_forward.5} parent=1 // pred_region
      _
    $region17: #{cnn_forward.5} parent=1 // pred_fallthru
      _
    // Predicated region
    $region18: #{cnn_forward.5} parent=1 // pred_check
      _
    $region19: #{cnn_forward.5} parent=1 // pred_check_branch
      %22 = sbr.rel (0) target = $region21
    $region20: #{cnn_forward.5} parent=1 // pred_region
      _
    $region21: #{cnn_forward.5} parent=1 // pred_fallthru
      _
    // Predicated region
    $region22: #{cnn_forward.5} parent=1 // pred_check
      _
    $region23: #{cnn_forward.5} parent=1 // pred_check_branch
      %24 = sbr.rel (0) target = $region25
    $region24: #{cnn_forward.5} parent=1 // pred_region
      _
    $region25: #{cnn_forward.5} parent=1 // pred_fallthru
      _
    // Predicated region
    $region26: #{cnn_forward.5} parent=1 // pred_check
      _
    $region27: #{cnn_forward.5} parent=1 // pred_check_branch
      %26 = sbr.rel (0) target = $region29
    $region28: #{cnn_forward.5} parent=1 // pred_region
      _
    $region29: #{cnn_forward.5} parent=1 // pred_fallthru
      _
    %v27 = vld [vmem:[%s0] sm:$0xff]
    %v28 = vld [vmem:[%s1] sm:$0xff]
    %v29 = vld [vmem:[%s1 + $0x8] sm:$0xff]
    %v30 = vld [vmem:[%s1 + $0x10] sm:$0xff]
    %v31 = vld [vmem:[%s1 + $0x18] sm:$0xff]
    %v32 = vld [vmem:[%s1 + $0x20] sm:$0xff]
    %v33 = vld [vmem:[%s1 + $0x28] sm:$0xff]
    %v34 = vld [vmem:[%s1 + $0x30] sm:$0xff]
    %v35 = vld [vmem:[%s1 + $0x38] sm:$0xff]
    %v36 = vld [vmem:[%s1 + $0x40] sm:$0xff]
    %v37 = vld [vmem:[%s1 + $0x48] sm:$0xff]
    %v38 = vld [vmem:[%s1 + $0x50] sm:$0xff]
    %v39 = vld [vmem:[%s1 + $0x58] sm:$0xff]
    %v40 = vld [vmem:[%s1 + $0x60] sm:$0xff]
    %v41 = vld [vmem:[%s1 + $0x68] sm:$0xff]
    %v42 = vld [vmem:[%s1 + $0x70] sm:$0xff]
    %v43 = vld [vmem:[%s1 + $0x78] sm:$0xff]
    %v44 = vld [vmem:[%s1 + $0x80] sm:$0xff]
    %v45 = vld [vmem:[%s1 + $0x88] sm:$0xff]
    %v46 = vld [vmem:[%s1 + $0x90] sm:$0xff]
    %v47 = vld [vmem:[%s1 + $0x98] sm:$0xff]
    %v48 = vld [vmem:[%s1 + $0xa0] sm:$0xff]
    %v49 = vld [vmem:[%s1 + $0xa8] sm:$0xff]
    %v50 = vld [vmem:[%s1 + $0xb0] sm:$0xff]
    %v51 = vld [vmem:[%s1 + $0xb8] sm:$0xff]
    %v52 = vld [vmem:[%s1 + $0xc0] sm:$0xff]
    %v53 = vld [vmem:[%s1 + $0xc8] sm:$0xff]
    %v54 = vld [vmem:[%s1 + $0xd0] sm:$0xff]
    %v55 = vld [vmem:[%s1 + $0xd8] sm:$0xff]
    %v56 = vld [vmem:[%s1 + $0xe0] sm:$0xff]
    %v57 = vld [vmem:[%s1 + $0xe8] sm:$0xff]
    %v58 = vld [vmem:[%s1 + $0xf0] sm:$0xff]
    %v59 = vld [vmem:[%s1 + $0xf8] sm:$0xff]
    %v60 = vld [vmem:[%s1 + $0x100] sm:$0xff]
    %v61 = vld [vmem:[%s1 + $0x108] sm:$0xff]
    %v62 = vld [vmem:[%s1 + $0x110] sm:$0xff]
    %v63 = vld [vmem:[%s1 + $0x118] sm:$0xff]
    %v64 = vld [vmem:[%s1 + $0x120] sm:$0xff]
    %v65 = vld [vmem:[%s1 + $0x128] sm:$0xff]
    %v66 = vld [vmem:[%s1 + $0x130] sm:$0xff]
    %v67 = vld [vmem:[%s1 + $0x138] sm:$0xff]
    %v68 = vld [vmem:[%s1 + $0x140] sm:$0xff]
    %v69 = vld [vmem:[%s1 + $0x148] sm:$0xff]
    %v70 = vld [vmem:[%s1 + $0x150] sm:$0xff]
    %v71 = vld [vmem:[%s1 + $0x158] sm:$0xff]
    %v72 = vld [vmem:[%s1 + $0x160] sm:$0xff]
    %v73 = vld [vmem:[%s1 + $0x168] sm:$0xff]
    %v74 = vld [vmem:[%s1 + $0x170] sm:$0xff]
    %v75 = vld [vmem:[%s1 + $0x178] sm:$0xff]
    %v76 = vld [vmem:[%s1 + $0x180] sm:$0xff]
    %v77 = vld [vmem:[%s1 + $0x188] sm:$0xff]
    %v78 = vld [vmem:[%s2] sm:$0x1]
    %v80 = vlaneseq
    %v81 = vshrl.u32 %v80, 7
    %v82 = vsub.s32 0, %v81
    %v83 = vrot.slane %v78, %v82
    %v86 = vcombine.high %v27, %v27
    %v88 = vunpack.c.l.s4 1983009808
    %v89 = vunpack.c.0.s8 %v88
    %v90 = vlaneseq
    %v91 = vshrl.u32 %v90, 7
    %v92 = vsub.s32 %v89, %v91
    %v93 = vrot.slane %v27, %v92
    %v95 = vunpack.c.l.s4 1983009808
    %v96 = vunpack.c.0.s8 %v95
    %v97 = vlaneseq
    %v98 = vshrl.u32 %v97, 7
    %v99 = vsub.s32 %v96, %v98
    %v100 = vrot.slane %v86, %v99
    %v101 = vcombine.high %v93, %v93
    %v102 = vcombine.high %v100, %v100
    %vm106 = vcmask 130048
    %v107 = vsel %vm106, %v102, 0
    %109 = vmatprep.subr.mxu0 0.0
    %110 = vmatpush1.msra.mxu0 %v28
    %111 = vmatprep.subr.mxu0 0.0
    %112 = vmatpush1.msra.mxu0 %v29
    %113 = vmatprep.subr.mxu0 0.0
    %114 = vmatpush1.msra.mxu0 %v30
    %115 = vmatprep.subr.mxu0 0.0
    %116 = vmatpush1.msra.mxu0 %v31
    %117 = vmatprep.subr.mxu0 0.0
    %118 = vmatpush1.msra.mxu0 %v32
    %119 = vmatprep.subr.mxu0 0.0
    %120 = vmatpush1.msra.mxu0 %v33
    %121 = vmatprep.subr.mxu0 0.0
    %122 = vmatpush1.msra.mxu0 %v34
    %123 = vmatprep.subr.mxu0 0.0
    %124 = vmatpush1.msra.mxu0 %v35
    %125 = vmatprep.subr.mxu0 0.0
    %126 = vmatpush1.msra.mxu0 %v36
    %127 = vmatprep.subr.mxu0 0.0
    %128 = vmatpush1.msra.mxu0 %v37
    %129 = vmatprep.subr.mxu0 0.0
    %130 = vmatpush1.msra.mxu0 %v38
    %131 = vmatprep.subr.mxu0 0.0
    %132 = vmatpush1.msra.mxu0 %v39
    %133 = vmatprep.subr.mxu0 0.0
    %134 = vmatpush1.msra.mxu0 %v40
    %135 = vmatprep.subr.mxu0 0.0
    %136 = vmatpush1.msra.mxu0 %v41
    %137 = vmatprep.subr.mxu0 0.0
    %138 = vmatpush1.msra.mxu0 %v42
    %139 = vmatprep.subr.mxu0 0.0
    %140 = vmatpush1.msra.mxu0 %v43
    %141 = vmatprep.subr.mxu0 0.0
    %142 = vmatpush1.msra.mxu0 %v44
    %143 = vmatprep.subr.mxu0 0.0
    %144 = vmatpush1.msra.mxu0 %v45
    %145 = vmatprep.subr.mxu0 0.0
    %146 = vmatpush1.msra.mxu0 %v46
    %147 = vmatprep.subr.mxu0 0.0
    %148 = vmatpush1.msra.mxu0 %v47
    %149 = vmatprep.subr.mxu0 0.0
    %150 = vmatpush1.msra.mxu0 %v48
    %151 = vmatprep.subr.mxu0 0.0
    %152 = vmatpush1.msra.mxu0 %v49
    %153 = vmatprep.subr.mxu0 0.0
    %154 = vmatpush1.msra.mxu0 %v50
    %155 = vmatprep.subr.mxu0 0.0
    %156 = vmatpush1.msra.mxu0 %v51
    %157 = vmatprep.subr.mxu0 0.0
    %158 = vmatpush1.msra.mxu0 %v52
    %159 = vmatprep.subr.mxu0 0.0
    %160 = vmatpush1.msra.mxu0 %v53
    %161 = vmatprep.subr.mxu0 0.0
    %162 = vmatpush1.msra.mxu0 %v54
    %163 = vmatprep.subr.mxu0 0.0
    %164 = vmatpush1.msra.mxu0 %v55
    %165 = vmatprep.subr.mxu0 0.0
    %166 = vmatpush1.msra.mxu0 %v56
    %167 = vmatprep.subr.mxu0 0.0
    %168 = vmatpush1.msra.mxu0 %v57
    %169 = vmatprep.subr.mxu0 0.0
    %170 = vmatpush1.msra.mxu0 %v58
    %171 = vmatprep.subr.mxu0 0.0
    %172 = vmatpush1.msra.mxu0 %v59
    %173 = vmatprep.mubr.f32.mxu0 %v101
    %174 = vmatmul.mubr.f32.gmra.mrb[0].mxu0 %v93
    %v175 = vpop.f32.mrb[0].mxu0
    %v176 = vadd.f32 %v83, %v175
    %v177 = vpop.f32.mrb[0].mxu0
    %178 = vdwg.mxu0
    %179 = vmatprep.subr.mxu0 0.0
    %180 = vmatpush1.msra.mxu0 %v60
    %181 = vmatprep.subr.mxu0 0.0
    %182 = vmatpush1.msra.mxu0 %v61
    %183 = vmatprep.subr.mxu0 0.0
    %184 = vmatpush1.msra.mxu0 %v62
    %185 = vmatprep.subr.mxu0 0.0
    %186 = vmatpush1.msra.mxu0 %v63
    %187 = vmatprep.subr.mxu0 0.0
    %188 = vmatpush1.msra.mxu0 %v64
    %189 = vmatprep.subr.mxu0 0.0
    %190 = vmatpush1.msra.mxu0 %v65
    %191 = vmatprep.subr.mxu0 0.0
    %192 = vmatpush1.msra.mxu0 %v66
    %193 = vmatprep.subr.mxu0 0.0
    %194 = vmatpush1.msra.mxu0 %v67
    %195 = vmatprep.subr.mxu0 0.0
    %196 = vmatpush1.msra.mxu0 %v68
    %197 = vmatprep.subr.mxu0 0.0
    %198 = vmatpush1.msra.mxu0 %v69
    %199 = vmatprep.subr.mxu0 0.0
    %200 = vmatpush1.msra.mxu0 %v70
    %201 = vmatprep.subr.mxu0 0.0
    %202 = vmatpush1.msra.mxu0 %v71
    %203 = vmatprep.subr.mxu0 0.0
    %204 = vmatpush1.msra.mxu0 %v72
    %205 = vmatprep.subr.mxu0 0.0
    %206 = vmatpush1.msra.mxu0 %v73
    %207 = vmatprep.subr.mxu0 0.0
    %208 = vmatpush1.msra.mxu0 %v74
    %209 = vmatprep.subr.mxu0 0.0
    %210 = vmatpush1.msra.mxu0 %v75
    %211 = vmatprep.subr.mxu0 0.0
    %212 = vmatpush1.msra.mxu0 %v76
    %213 = vmatprep.subr.mxu0 0.0
    %214 = vmatpush1.msra.mxu0 %v77
    %215 = vmatprep.subr.mxu0 0.0
    %216 = vmatpush1.msra.mxu0 0.0
    %217 = vmatprep.subr.mxu0 0.0
    %218 = vmatpush1.msra.mxu0 0.0
    %219 = vmatprep.subr.mxu0 0.0
    %220 = vmatpush1.msra.mxu0 0.0
    %221 = vmatprep.subr.mxu0 0.0
    %222 = vmatpush1.msra.mxu0 0.0
    %223 = vmatprep.subr.mxu0 0.0
    %224 = vmatpush1.msra.mxu0 0.0
    %225 = vmatprep.subr.mxu0 0.0
    %226 = vmatpush1.msra.mxu0 0.0
    %227 = vmatprep.subr.mxu0 0.0
    %228 = vmatpush1.msra.mxu0 0.0
    %229 = vmatprep.subr.mxu0 0.0
    %230 = vmatpush1.msra.mxu0 0.0
    %231 = vmatprep.subr.mxu0 0.0
    %232 = vmatpush1.msra.mxu0 0.0
    %233 = vmatprep.subr.mxu0 0.0
    %234 = vmatpush1.msra.mxu0 0.0
    %235 = vmatprep.subr.mxu0 0.0
    %236 = vmatpush1.msra.mxu0 0.0
    %237 = vmatprep.subr.mxu0 0.0
    %238 = vmatpush1.msra.mxu0 0.0
    %239 = vmatprep.subr.mxu0 0.0
    %240 = vmatpush1.msra.mxu0 0.0
    %241 = vmatprep.subr.mxu0 0.0
    %242 = vmatpush1.msra.mxu0 0.0
    %243 = vmatprep.mubr.f32.mxu0 %v107
    %244 = vmatmul.mubr.f32.gmra.mrb[0].mxu0 %v100
    %v245 = vpop.f32.mrb[0].mxu0
    %v246 = vadd.f32 %v176, %v245
    %v247 = vpop.f32.mrb[0].mxu0
    %248 = vdwg.mxu0
    %v249 = vmax.f32 %v246, 0.0
    %v250 = vld [vmem:[%s3] sm:$0xff]
    %v251 = vld [vmem:[%s3 + $0x8] sm:$0xff]
    %v252 = vld [vmem:[%s3 + $0x10] sm:$0xff]
    %v253 = vld [vmem:[%s3 + $0x18] sm:$0xff]
    %v254 = vld [vmem:[%s3 + $0x20] sm:$0xff]
    %v255 = vld [vmem:[%s3 + $0x28] sm:$0xff]
    %v256 = vld [vmem:[%s3 + $0x30] sm:$0xff]
    %v257 = vld [vmem:[%s3 + $0x38] sm:$0xff]
    %v258 = vld [vmem:[%s3 + $0x40] sm:$0xff]
    %v259 = vld [vmem:[%s3 + $0x48] sm:$0xff]
    %v260 = vld [vmem:[%s3 + $0x50] sm:$0xff]
    %v261 = vld [vmem:[%s3 + $0x58] sm:$0xff]
    %v262 = vld [vmem:[%s3 + $0x60] sm:$0xff]
    %v263 = vld [vmem:[%s3 + $0x68] sm:$0xff]
    %v264 = vld [vmem:[%s3 + $0x70] sm:$0xff]
    %v265 = vld [vmem:[%s4] sm:$0x1]
    %v267 = vlaneseq
    %v268 = vshrl.u32 %v267, 7
    %v269 = vsub.s32 0, %v268
    %v270 = vrot.slane %v265, %v269
    %vm272 = vcmask 982016
    %v274 = vsel %vm272, %v249, 0
    %276 = vmatprep.subr.mxu0 0.0
    %277 = vmatpush1.msra.mxu0 %v250
    %278 = vmatprep.subr.mxu0 0.0
    %279 = vmatpush1.msra.mxu0 %v251
    %280 = vmatprep.subr.mxu0 0.0
    %281 = vmatpush1.msra.mxu0 %v252
    %282 = vmatprep.subr.mxu0 0.0
    %283 = vmatpush1.msra.mxu0 %v253
    %284 = vmatprep.subr.mxu0 0.0
    %285 = vmatpush1.msra.mxu0 %v254
    %286 = vmatprep.subr.mxu0 0.0
    %287 = vmatpush1.msra.mxu0 %v255
    %288 = vmatprep.subr.mxu0 0.0
    %289 = vmatpush1.msra.mxu0 %v256
    %290 = vmatprep.subr.mxu0 0.0
    %291 = vmatpush1.msra.mxu0 %v257
    %292 = vmatprep.subr.mxu0 0.0
    %293 = vmatpush1.msra.mxu0 %v258
    %294 = vmatprep.subr.mxu0 0.0
    %295 = vmatpush1.msra.mxu0 %v259
    %296 = vmatprep.subr.mxu0 0.0
    %297 = vmatpush1.msra.mxu0 %v260
    %298 = vmatprep.subr.mxu0 0.0
    %299 = vmatpush1.msra.mxu0 %v261
    %300 = vmatprep.subr.mxu0 0.0
    %301 = vmatpush1.msra.mxu0 %v262
    %302 = vmatprep.subr.mxu0 0.0
    %303 = vmatpush1.msra.mxu0 %v263
    %304 = vmatprep.subr.mxu0 0.0
    %305 = vmatpush1.msra.mxu0 %v264
    %306 = vmatprep.subr.mxu0 0.0
    %307 = vmatpush1.msra.mxu0 0.0
    %308 = vmatprep.subr.mxu0 0.0
    %309 = vmatpush1.msra.mxu0 0.0
    %310 = vmatprep.subr.mxu0 0.0
    %311 = vmatpush1.msra.mxu0 0.0
    %312 = vmatprep.subr.mxu0 0.0
    %313 = vmatpush1.msra.mxu0 0.0
    %314 = vmatprep.subr.mxu0 0.0
    %315 = vmatpush1.msra.mxu0 0.0
    %316 = vmatprep.subr.mxu0 0.0
    %317 = vmatpush1.msra.mxu0 0.0
    %318 = vmatprep.subr.mxu0 0.0
    %319 = vmatpush1.msra.mxu0 0.0
    %320 = vmatprep.subr.mxu0 0.0
    %321 = vmatpush1.msra.mxu0 0.0
    %322 = vmatprep.subr.mxu0 0.0
    %323 = vmatpush1.msra.mxu0 0.0
    %324 = vmatprep.subr.mxu0 0.0
    %325 = vmatpush1.msra.mxu0 0.0
    %326 = vmatprep.subr.mxu0 0.0
    %327 = vmatpush1.msra.mxu0 0.0
    %328 = vmatprep.subr.mxu0 0.0
    %329 = vmatpush1.msra.mxu0 0.0
    %330 = vmatprep.subr.mxu0 0.0
    %331 = vmatpush1.msra.mxu0 0.0
    %332 = vmatprep.subr.mxu0 0.0
    %333 = vmatpush1.msra.mxu0 0.0
    %334 = vmatprep.subr.mxu0 0.0
    %335 = vmatpush1.msra.mxu0 0.0
    %336 = vmatprep.subr.mxu0 0.0
    %337 = vmatpush1.msra.mxu0 0.0
    %338 = vmatprep.subr.mxu0 0.0
    %339 = vmatpush1.msra.mxu0 0.0
    %340 = vmatprep.mubr.f32.mxu0 0.0
    %341 = vmatmul.mubr.f32.gmra.mrb[0].mxu0 %v274
    %v342 = vpop.f32.mrb[0].mxu0
    %v343 = vadd.f32 %v270, %v342
    %v344 = vpop.f32.mrb[0].mxu0
    %345 = vdwg.mxu0
    %v346 = vmax.f32 %v343, 0.0
    %v347 = vld [vmem:[%s5] sm:$0xff]
    %v348 = vld [vmem:[%s5 + $0x8] sm:$0xff]
    %v349 = vld [vmem:[%s5 + $0x10] sm:$0xff]
    %v350 = vld [vmem:[%s5 + $0x18] sm:$0xff]
    %v351 = vld [vmem:[%s5 + $0x20] sm:$0xff]
    %v352 = vld [vmem:[%s5 + $0x28] sm:$0xff]
    %v353 = vld [vmem:[%s5 + $0x30] sm:$0xff]
    %v354 = vld [vmem:[%s5 + $0x38] sm:$0xff]
    %v355 = vld [vmem:[%s5 + $0x40] sm:$0xff]
    %v356 = vld [vmem:[%s5 + $0x48] sm:$0xff]
    %v357 = vld [vmem:[%s5 + $0x50] sm:$0xf]
    %v358 = vld [vmem:[%s6] sm:$0x1]
    %v360 = vlaneseq
    %v361 = vshrl.u32 %v360, 7
    %v362 = vsub.s32 0, %v361
    %v363 = vrot.slane %v358, %v362
    %vm365 = vcmask 687104
    %v367 = vsel %vm365, %v346, 0
    %vm369 = vcmask 1043456
    %v371 = vsel %vm369, %v357, 0
    %373 = vmatprep.subr.mxu0 0.0
    %374 = vmatpush1.msra.mxu0 %v347
    %375 = vmatprep.subr.mxu0 0.0
    %376 = vmatpush1.msra.mxu0 %v348
    %377 = vmatprep.subr.mxu0 0.0
    %378 = vmatpush1.msra.mxu0 %v349
    %379 = vmatprep.subr.mxu0 0.0
    %380 = vmatpush1.msra.mxu0 %v350
    %381 = vmatprep.subr.mxu0 0.0
    %382 = vmatpush1.msra.mxu0 %v351
    %383 = vmatprep.subr.mxu0 0.0
    %384 = vmatpush1.msra.mxu0 %v352
    %385 = vmatprep.subr.mxu0 0.0
    %386 = vmatpush1.msra.mxu0 %v353
    %387 = vmatprep.subr.mxu0 0.0
    %388 = vmatpush1.msra.mxu0 %v354
    %389 = vmatprep.subr.mxu0 0.0
    %390 = vmatpush1.msra.mxu0 %v355
    %391 = vmatprep.subr.mxu0 0.0
    %392 = vmatpush1.msra.mxu0 %v356
    %393 = vmatprep.subr.mxu0 0.0
    %394 = vmatpush1.msra.mxu0 %v371
    %395 = vmatprep.subr.mxu0 0.0
    %396 = vmatpush1.msra.mxu0 0.0
    %397 = vmatprep.subr.mxu0 0.0
    %398 = vmatpush1.msra.mxu0 0.0
    %399 = vmatprep.subr.mxu0 0.0
    %400 = vmatpush1.msra.mxu0 0.0
    %401 = vmatprep.subr.mxu0 0.0
    %402 = vmatpush1.msra.mxu0 0.0
    %403 = vmatprep.subr.mxu0 0.0
    %404 = vmatpush1.msra.mxu0 0.0
    %405 = vmatprep.subr.mxu0 0.0
    %406 = vmatpush1.msra.mxu0 0.0
    %407 = vmatprep.subr.mxu0 0.0
    %408 = vmatpush1.msra.mxu0 0.0
    %409 = vmatprep.subr.mxu0 0.0
    %410 = vmatpush1.msra.mxu0 0.0
    %411 = vmatprep.subr.mxu0 0.0
    %412 = vmatpush1.msra.mxu0 0.0
    %413 = vmatprep.subr.mxu0 0.0
    %414 = vmatpush1.msra.mxu0 0.0
    %415 = vmatprep.subr.mxu0 0.0
    %416 = vmatpush1.msra.mxu0 0.0
    %417 = vmatprep.subr.mxu0 0.0
    %418 = vmatpush1.msra.mxu0 0.0
    %419 = vmatprep.subr.mxu0 0.0
    %420 = vmatpush1.msra.mxu0 0.0
    %421 = vmatprep.subr.mxu0 0.0
    %422 = vmatpush1.msra.mxu0 0.0
    %423 = vmatprep.subr.mxu0 0.0
    %424 = vmatpush1.msra.mxu0 0.0
    %425 = vmatprep.subr.mxu0 0.0
    %426 = vmatpush1.msra.mxu0 0.0
    %427 = vmatprep.subr.mxu0 0.0
    %428 = vmatpush1.msra.mxu0 0.0
    %429 = vmatprep.subr.mxu0 0.0
    %430 = vmatpush1.msra.mxu0 0.0
    %431 = vmatprep.subr.mxu0 0.0
    %432 = vmatpush1.msra.mxu0 0.0
    %433 = vmatprep.subr.mxu0 0.0
    %434 = vmatpush1.msra.mxu0 0.0
    %435 = vmatprep.subr.mxu0 0.0
    %436 = vmatpush1.msra.mxu0 0.0
    %437 = vmatprep.mubr.f32.mxu0 0.0
    %438 = vmatmul.mubr.f32.gmra.mrb[0].mxu0 %v367
    %v439 = vpop.f32.mrb[0].mxu0
    %v440 = vadd.f32 %v363, %v439
    %v441 = vpop.f32.mrb[0].mxu0
    %442 = vdwg.mxu0
    %vm443 = vcmask 74752
    %444 = vst.msk [vmem:[#allocation2] sm:$0x3] %vm443, %v440
    // Predicated region
    $region30: #{cnn_forward.5} parent=1 // pred_check
      _
    $region31: #{cnn_forward.5} parent=1 // pred_check_branch
      %446 = sbr.rel (0) target = $region33
    $region32: #{cnn_forward.5} parent=1 // pred_region
      %s448 = ssub.s32 32, 32
      %449 = vsyncadd [#allocation3], %s448
      %s451 = sshll.u32 [#allocation2], 4
      %s452 = int_to_ptr.vmem [resolvable:$true] %s451
      %454 = dma.vmem_to_hbm [thread:$0]  %s452, 32, %s7, [#allocation3]
    $region33: #{cnn_forward.5} parent=1 // pred_fallthru
      _
    // Predicated region
    $region34: #{cnn_forward.5} parent=1 // pred_check
      _
    $region35: #{cnn_forward.5} parent=1 // pred_check_branch
      %456 = sbr.rel (0) target = $region37
    $region36: #{cnn_forward.5} parent=1 // pred_region
      %457 = dma.done [#allocation3], 32
    $region37: #{cnn_forward.5} parent=1 // pred_fallthru
      _
    %458 = vsyncpa [#allocation3], 1

</llo_original>
